<compile_context>
chip_gen: v5e
topology: v5e:2x2
jax: 0.10.0
libtpu: 0.0.40
codegen_flags: <defaults>
</compile_context>

<pallas_src>
import jax
import jax.numpy as jnp
from jax.experimental import pallas as pl
from jax.experimental.pallas import tpu as pltpu


def _round_up(n, m):
    return ((n + m - 1) // m) * m


def _reorder_gates(w, H):
    """Reorder last-axis gate blocks from PyTorch [i, f, g, o] to [i, f, o, g]."""
    return jnp.concatenate(
        [w[..., 0:2 * H], w[..., 3 * H:4 * H], w[..., 2 * H:3 * H]], axis=-1)


# --------------------------------------------------------------------------
# Fused kernel builder: full model forward in one kernel invocation.
# Gate order inside the kernel (post-prepare_params) is [i, f, o, g].
# --------------------------------------------------------------------------
def _build_fused_kernel(B_pad, T, lstm_dims, n_linears, num_linear):
    """lstm_dims: list (per LSTM stack) of list (per layer) of (in_dim, hidden)."""

    def kernel(*refs):
        x_ref = refs[0]            # (T*B_pad, In0) time-major, batch-padded
        out_ref = refs[-1]         # (B_pad, 128)  lane-dense padded head output
        w_refs = refs[1:-1]

        # ---- unpack weight refs into a flat, execution-ordered layer list ----
        idx = 0
        flat = []                  # (stack k, layer l, H, wih_ref, whh_ref, b_ref)
        for k, stack in enumerate(lstm_dims):
            for l, (_in_dim, H) in enumerate(stack):
                flat.append((k, l, H, w_refs[idx], w_refs[idx + 1], w_refs[idx + 2]))
                idx += 3
        lin_refs = []
        for _ in range(n_linears):
            lin_refs.append((w_refs[idx], w_refs[idx + 1]))
            idx += 2

        # ---- layer-0 input projection: one hoisted 2-D matmul -------------
        wih0 = flat[0][3][...]                                  # (In0, 4H)
        b0 = flat[0][5][...]                                    # (1, 4H)
        gx0 = jnp.dot(x_ref[...], wih0,
                      preferred_element_type=jnp.float32) + b0  # (T*B_pad, 4H)
        # Tile-aligned static views (B_pad == 8 sublanes, 4H == 128 lanes).
        gx_list = [gx0[t * B_pad:(t + 1) * B_pad, :] for t in range(T)]

        final_h = {}   # final hidden/cell per (stack, layer) for inter-stack chaining
        final_c = {}
        h_last = None

        for j, (k, l, H, _wih_ref, whh_ref, _b_ref) in enumerate(flat):
            whh = whh_ref[...]                                  # (H, 4H)
            is_last_layer = (j == len(flat) - 1)
            if not is_last_layer:
                _nk, _nl, _nH, nwih_ref, _nwhh_ref, nb_ref = flat[j + 1]
                nwih = nwih_ref[...]                            # (H, 4H_next)
                nb = nb_ref[...]                                # (1, 4H_next)

            # PyTorch semantics: stack 0 starts from zeros; stack k>0 starts
            # from the final (h, c) of the same layer index of stack k-1.
            if k == 0:
                h = jnp.zeros((B_pad, H), jnp.float32)
                c = jnp.zeros((B_pad, H), jnp.float32)
            else:
                h = final_h[(k - 1, l)]
                c = final_c[(k - 1, l)]

            next_gx_list = []
            # Fully unrolled recurrence; h/c stay in vregs.
            for t in range(T):
                # dot + add consumed immediately (MRB-friendly on v7x).
                g = jnp.dot(h, whh, preferred_element_type=jnp.float32) + gx_list[t]
                sig = jax.nn.sigmoid(g)       # one full-width EUP pass (lanes 0:3H used)
                th = jnp.tanh(g)              # one full-width EUP pass (lanes 3H:4H used)
                i_g = sig[:, 0:H]
                f_g = sig[:, H:2 * H]
                o_g = sig[:, 2 * H:3 * H]
                g_g = th[:, 3 * H:4 * H]
                c = f_g * c + i_g * g_g
                h = o_g * jnp.tanh(c)
                if not is_last_layer:
                    # Next layer's step-t input projection: independent MXU
                    # work interleaved into this layer's serial chain.
                    next_gx_list.append(
                        jnp.dot(h, nwih, preferred_element_type=jnp.float32) + nb)

            final_h[(k, l)] = h
            final_c[(k, l)] = c
            gx_list = next_gx_list
            h_last = h

        # TODO(synk): original PyTorch does `out[0][:, -1, :]`, which over-indexes
        # a 2-D tensor; implementing the evident intent (last time step of the
        # top layer's output sequence), which equals the final hidden state h.
        feat = h_last                                           # (B_pad, H)
        for i, (w_ref, bb_ref) in enumerate(lin_refs):
            feat = jnp.dot(feat, w_ref[...],
                           preferred_element_type=jnp.float32) + bb_ref[...]
            if i < num_linear:
                feat = jnp.maximum(feat, 0.0)
        out_ref[...] = feat.astype(out_ref.dtype)               # lane-dense store

    return kernel


# --------------------------------------------------------------------------
# One-time parameter preparation: transpose weights, fuse biases, reorder
# gate columns to [i, f, o, g], pad MLP head to 128 output lanes.
# --------------------------------------------------------------------------
def prepare_params(params, lane=128):
    lstms, lstm_dims = [], []
    for stack in params["lstms"]:
        sk, sd = [], []
        for p in stack:
            H = p["w_hh"].shape[1]
            in_dim = p["w_ih"].shape[1]
            wih = _reorder_gates(jnp.transpose(p["w_ih"]), H)                  # (in, 4H)
            whh = _reorder_gates(jnp.transpose(p["w_hh"]), H)                  # (H, 4H)
            b = _reorder_gates((p["b_ih"] + p["b_hh"]).reshape(1, 4 * H), H)   # (1, 4H)
            sk.append((wih, whh, b))
            sd.append((in_dim, H))
        lstms.append(sk)
        lstm_dims.append(sd)

    # MLP head: zero-pad every output dim (and the following input dim) to the
    # lane width so all head matmuls and the final store are lane-dense.
    linears = []
    prev_out_pad = None
    for (w, b) in params["linears"]:
        dout, din = w.shape
        wt = jnp.transpose(w)                                   # (din, dout)
        din_pad = din if prev_out_pad is None else prev_out_pad
        dout_pad = _round_up(dout, lane)
        wp = jnp.zeros((din_pad, dout_pad), wt.dtype).at[:din, :dout].set(wt)
        bp = jnp.zeros((1, dout_pad), b.dtype).at[0, :dout].set(b)
        linears.append((wp, bp))
        prev_out_pad = dout_pad
    return dict(lstms=lstms, lstm_dims=lstm_dims, linears=linears)


# --------------------------------------------------------------------------
# Full model forward: single pallas_call (no grid).
# --------------------------------------------------------------------------
def model_forward(x, kparams, num_linear):
    B, T, In0 = x.shape
    lstm_dims = kparams["lstm_dims"]

    # Chaining (h, c) between LSTM stacks (PyTorch `lstm_k(out, (h, c))`)
    # requires equal num_layers and hidden_size across stacks.
    for k in range(1, len(lstm_dims)):
        if (len(lstm_dims[k]) != len(lstm_dims[k - 1])
                or lstm_dims[k][0][1] != lstm_dims[k - 1][0][1]):
            raise ValueError(
                "Chaining (h, c) between LSTM stacks requires equal num_layers "
                f"and hidden_size across stacks; got dims={lstm_dims}")

    # Pad batch to the f32 sublane count and fold to time-major flat layout.
    # These are two trivial XLA ops in the wrapper; they make every per-step
    # slab inside the kernel an (8,128)-aligned free view.
    B_pad = max(8, _round_up(B, 8))
    x_p = jnp.pad(x, ((0, B_pad - B), (0, 0), (0, 0)))          # (B_pad, T, In0)
    x_flat = jnp.transpose(x_p, (1, 0, 2)).reshape(T * B_pad, In0)

    n_linears = len(kparams["linears"])
    out_lanes = kparams["linears"][-1][0].shape[1]              # padded (=128)
    kernel = _build_fused_kernel(B_pad, T, lstm_dims, n_linears, num_linear)

    args = [x_flat]
    for stack in kparams["lstms"]:
        for (wih, whh, b) in stack:
            args += [wih, whh, b]
    for (w, b) in kparams["linears"]:
        args += [w, b]

    out = pl.pallas_call(
        kernel,
        out_shape=jax.ShapeDtypeStruct((B_pad, out_lanes), x.dtype),
        in_specs=[pl.BlockSpec(memory_space=pltpu.MemorySpace.VMEM)
                  for _ in args],
        out_specs=pl.BlockSpec(memory_space=pltpu.MemorySpace.VMEM),
    )(*args)
    return out[:B, :1]


# --------------------------------------------------------------------------
# Pure-JAX reference for verification (original-layout params, PyTorch gate
# order i/f/g/o).
# --------------------------------------------------------------------------
def lstm_layer_ref(x, w_ih, w_hh, b_ih, b_hh, h0, c0):
    H = w_hh.shape[1]

    def step(carry, x_t):
        h, c = carry
        g = x_t @ w_ih.T + h @ w_hh.T + b_ih + b_hh
        i = jax.nn.sigmoid(g[:, :H])
        f = jax.nn.sigmoid(g[:, H:2 * H])
        gg = jnp.tanh(g[:, 2 * H:3 * H])
        o = jax.nn.sigmoid(g[:, 3 * H:])
        c = f * c + i * gg
        h = o * jnp.tanh(c)
        return (h, c), h

    (hT, cT), outs = jax.lax.scan(step, (h0, c0), jnp.transpose(x, (1, 0, 2)))
    return jnp.transpose(outs, (1, 0, 2)), hT, cT


def model_forward_ref(x, params, num_linear):
    out = x
    h = c = None
    for k, lstm_stack in enumerate(params["lstms"]):
        L = len(lstm_stack)
        H = lstm_stack[0]["w_hh"].shape[1]
        if k == 0:
            B = x.shape[0]
            h = jnp.zeros((L, B, H), jnp.float32)
            c = jnp.zeros((L, B, H), jnp.float32)
        hs, cs = [], []
        inp = out
        for l in range(L):
            p = lstm_stack[l]
            inp, hT, cT = lstm_layer_ref(inp, p["w_ih"], p["w_hh"],
                                         p["b_ih"], p["b_hh"], h[l], c[l])
            hs.append(hT)
            cs.append(cT)
        out = inp
        h = jnp.stack(hs)
        c = jnp.stack(cs)
    feat = out[:, -1, :]
    for i, (w, b) in enumerate(params["linears"]):
        feat = feat @ w.T + b
        if i < num_linear:
            feat = jnp.maximum(feat, 0.0)
    return feat


# --------------------------------------------------------------------------
def init_params(key, seq_len, hidden_size, num_layers, num_LSTM,
                num_linear, num_neurons):
    lstms = []
    for k in range(num_LSTM):
        in_size = seq_len if k == 0 else hidden_size[k - 1]
        stack = []
        for l in range(num_layers[k]):
            layer_in = in_size if l == 0 else hidden_size[k]
            H = hidden_size[k]
            key, k1, k2 = jax.random.split(key, 3)
            stack.append(dict(
                w_ih=jax.random.normal(k1, (4 * H, layer_in), jnp.float32)
                     * jnp.sqrt(2.0 / layer_in),
                w_hh=jax.random.normal(k2, (4 * H, H), jnp.float32)
                     * jnp.sqrt(2.0 / H),
                b_ih=jnp.zeros((4 * H,), jnp.float32),
                b_hh=jnp.zeros((4 * H,), jnp.float32),
            ))
        lstms.append(stack)

    linears = []
    dims_in = [hidden_size[-1]] + list(num_neurons)
    dims_out = list(num_neurons) + [1]
    for din, dout in zip(dims_in, dims_out):
        key, k1 = jax.random.split(key)
        w = jax.random.normal(k1, (dout, din), jnp.float32) * jnp.sqrt(2.0 / din)
        linears.append((w, jnp.zeros((dout,), jnp.float32)))
    return dict(lstms=lstms, linears=linears)


if __name__ == "__main__":
    # Config mirrors LSTM(seq_len, hidden_size, num_layers, num_LSTM,
    #                     num_linear, num_neurons, device)
    seq_len = 8                 # feature size per time step (nn.LSTM input_size)
    T = 8                       # number of time steps in the sequence
    hidden_size = [32, 32]      # must match across LSTMs (h, c are chained)
    num_layers = [1, 1]
    num_LSTM = 2
    num_linear = 2
    num_neurons = [16, 8]
    B = 2

    key = jax.random.PRNGKey(0)
    key, kx = jax.random.split(key)
    x = jax.random.normal(kx, (B, T, seq_len), jnp.float32)

    params = init_params(key, seq_len, hidden_size, num_layers, num_LSTM,
                         num_linear, num_neurons)
    kparams = prepare_params(params)   # one-time weight layout prep

    out = model_forward(x, kparams, num_linear)
    out = jax.block_until_ready(out)

    ref = jax.block_until_ready(model_forward_ref(x, params, num_linear))
    assert out.shape == (B, 1), out.shape
    assert jnp.allclose(out, ref, rtol=1e-4, atol=1e-4), (out, ref)
    print("KERNEL_OK")
</pallas_src>

<mosaic_0001>
module attributes {stable_mosaic.version = 11 : i64} {
  func.func @kernel(%arg0: memref<64x8xf32, #tpu.memory_space<vmem>>, %arg1: memref<8x128xf32, #tpu.memory_space<vmem>>, %arg2: memref<32x128xf32, #tpu.memory_space<vmem>>, %arg3: memref<1x128xf32, #tpu.memory_space<vmem>>, %arg4: memref<32x128xf32, #tpu.memory_space<vmem>>, %arg5: memref<32x128xf32, #tpu.memory_space<vmem>>, %arg6: memref<1x128xf32, #tpu.memory_space<vmem>>, %arg7: memref<32x128xf32, #tpu.memory_space<vmem>>, %arg8: memref<1x128xf32, #tpu.memory_space<vmem>>, %arg9: memref<128x128xf32, #tpu.memory_space<vmem>>, %arg10: memref<1x128xf32, #tpu.memory_space<vmem>>, %arg11: memref<128x128xf32, #tpu.memory_space<vmem>>, %arg12: memref<1x128xf32, #tpu.memory_space<vmem>>, %arg13: memref<8x128xf32, #tpu.memory_space<vmem>>) attributes {dimension_semantics = [], scalar_prefetch = 0 : i64, scratch_operands = 0 : i64, tpu.core_type = #tpu.core_type<tc>} {
    %c0 = arith.constant 0 : index
    %c0_0 = arith.constant 0 : index
    %0 = vector.load %arg1[%c0, %c0_0] : memref<8x128xf32, #tpu.memory_space<vmem>>, vector<8x128xf32>
    %c0_1 = arith.constant 0 : index
    %c0_2 = arith.constant 0 : index
    %1 = vector.load %arg3[%c0_1, %c0_2] : memref<1x128xf32, #tpu.memory_space<vmem>>, vector<1x128xf32>
    %c0_3 = arith.constant 0 : index
    %c0_4 = arith.constant 0 : index
    %2 = vector.load %arg0[%c0_3, %c0_4] : memref<64x8xf32, #tpu.memory_space<vmem>>, vector<64x8xf32>
    %cst = arith.constant dense<0.000000e+00> : vector<64x128xf32>
    %3 = tpu.matmul %2, %0, %cst {dimension_numbers = #tpu.dot_dimension_numbers<[1], [0], [0], [1], [0, 0, 1, 1], [], []>} : vector<64x8xf32>, vector<8x128xf32>, vector<64x128xf32> -> vector<64x128xf32>
    %4 = vector.broadcast %1 : vector<1x128xf32> to vector<64x128xf32>
    %5 = arith.addf %3, %4 : vector<64x128xf32>
    %6 = vector.extract_strided_slice %5 {offsets = [0, 0], sizes = [8, 128], strides = [1, 1]} : vector<64x128xf32> to vector<8x128xf32>
    %7 = vector.extract_strided_slice %5 {offsets = [8, 0], sizes = [8, 128], strides = [1, 1]} : vector<64x128xf32> to vector<8x128xf32>
    %8 = vector.extract_strided_slice %5 {offsets = [16, 0], sizes = [8, 128], strides = [1, 1]} : vector<64x128xf32> to vector<8x128xf32>
    %9 = vector.extract_strided_slice %5 {offsets = [24, 0], sizes = [8, 128], strides = [1, 1]} : vector<64x128xf32> to vector<8x128xf32>
    %10 = vector.extract_strided_slice %5 {offsets = [32, 0], sizes = [8, 128], strides = [1, 1]} : vector<64x128xf32> to vector<8x128xf32>
    %11 = vector.extract_strided_slice %5 {offsets = [40, 0], sizes = [8, 128], strides = [1, 1]} : vector<64x128xf32> to vector<8x128xf32>
    %12 = vector.extract_strided_slice %5 {offsets = [48, 0], sizes = [8, 128], strides = [1, 1]} : vector<64x128xf32> to vector<8x128xf32>
    %13 = vector.extract_strided_slice %5 {offsets = [56, 0], sizes = [8, 128], strides = [1, 1]} : vector<64x128xf32> to vector<8x128xf32>
    %c0_5 = arith.constant 0 : index
    %c0_6 = arith.constant 0 : index
    %14 = vector.load %arg2[%c0_5, %c0_6] : memref<32x128xf32, #tpu.memory_space<vmem>>, vector<32x128xf32>
    %c0_7 = arith.constant 0 : index
    %c0_8 = arith.constant 0 : index
    %15 = vector.load %arg4[%c0_7, %c0_8] : memref<32x128xf32, #tpu.memory_space<vmem>>, vector<32x128xf32>
    %c0_9 = arith.constant 0 : index
    %c0_10 = arith.constant 0 : index
    %16 = vector.load %arg6[%c0_9, %c0_10] : memref<1x128xf32, #tpu.memory_space<vmem>>, vector<1x128xf32>
    %cst_11 = arith.constant 0.000000e+00 : f32
    %17 = vector.broadcast %cst_11 : f32 to vector<8x32xf32>
    %cst_12 = arith.constant 0.000000e+00 : f32
    %18 = vector.broadcast %cst_12 : f32 to vector<8x32xf32>
    %cst_13 = arith.constant dense<0.000000e+00> : vector<8x128xf32>
    %19 = tpu.matmul %17, %14, %cst_13 {dimension_numbers = #tpu.dot_dimension_numbers<[1], [0], [0], [1], [0, 0, 1, 1], [], []>} : vector<8x32xf32>, vector<32x128xf32>, vector<8x128xf32> -> vector<8x128xf32>
    %20 = arith.addf %19, %6 : vector<8x128xf32>
    %21 = arith.negf %20 : vector<8x128xf32>
    %22 = math.exp %21 : vector<8x128xf32>
    %cst_14 = arith.constant 1.000000e+00 : f32
    %23 = vector.broadcast %cst_14 : f32 to vector<8x128xf32>
    %24 = arith.addf %23, %22 : vector<8x128xf32>
    %25 = arith.divf %23, %24 : vector<8x128xf32>
    %26 = math.tanh %20 : vector<8x128xf32>
    %27 = vector.extract_strided_slice %25 {offsets = [0, 0], sizes = [8, 32], strides = [1, 1]} : vector<8x128xf32> to vector<8x32xf32>
    %28 = vector.extract_strided_slice %25 {offsets = [0, 32], sizes = [8, 32], strides = [1, 1]} : vector<8x128xf32> to vector<8x32xf32>
    %29 = vector.extract_strided_slice %25 {offsets = [0, 64], sizes = [8, 32], strides = [1, 1]} : vector<8x128xf32> to vector<8x32xf32>
    %30 = vector.extract_strided_slice %26 {offsets = [0, 96], sizes = [8, 32], strides = [1, 1]} : vector<8x128xf32> to vector<8x32xf32>
    %31 = arith.mulf %28, %18 : vector<8x32xf32>
    %32 = arith.mulf %27, %30 : vector<8x32xf32>
    %33 = arith.addf %31, %32 : vector<8x32xf32>
    %34 = math.tanh %33 : vector<8x32xf32>
    %35 = arith.mulf %29, %34 : vector<8x32xf32>
    %cst_15 = arith.constant dense<0.000000e+00> : vector<8x128xf32>
    %36 = tpu.matmul %35, %15, %cst_15 {dimension_numbers = #tpu.dot_dimension_numbers<[1], [0], [0], [1], [0, 0, 1, 1], [], []>} : vector<8x32xf32>, vector<32x128xf32>, vector<8x128xf32> -> vector<8x128xf32>
    %37 = vector.broadcast %16 : vector<1x128xf32> to vector<8x128xf32>
    %38 = arith.addf %36, %37 : vector<8x128xf32>
    %cst_16 = arith.constant dense<0.000000e+00> : vector<8x128xf32>
    %39 = tpu.matmul %35, %14, %cst_16 {dimension_numbers = #tpu.dot_dimension_numbers<[1], [0], [0], [1], [0, 0, 1, 1], [], []>} : vector<8x32xf32>, vector<32x128xf32>, vector<8x128xf32> -> vector<8x128xf32>
    %40 = arith.addf %39, %7 : vector<8x128xf32>
    %41 = arith.negf %40 : vector<8x128xf32>
    %42 = math.exp %41 : vector<8x128xf32>
    %cst_17 = arith.constant 1.000000e+00 : f32
    %43 = vector.broadcast %cst_17 : f32 to vector<8x128xf32>
    %44 = arith.addf %43, %42 : vector<8x128xf32>
    %45 = arith.divf %43, %44 : vector<8x128xf32>
    %46 = math.tanh %40 : vector<8x128xf32>
    %47 = vector.extract_strided_slice %45 {offsets = [0, 0], sizes = [8, 32], strides = [1, 1]} : vector<8x128xf32> to vector<8x32xf32>
    %48 = vector.extract_strided_slice %45 {offsets = [0, 32], sizes = [8, 32], strides = [1, 1]} : vector<8x128xf32> to vector<8x32xf32>
    %49 = vector.extract_strided_slice %45 {offsets = [0, 64], sizes = [8, 32], strides = [1, 1]} : vector<8x128xf32> to vector<8x32xf32>
    %50 = vector.extract_strided_slice %46 {offsets = [0, 96], sizes = [8, 32], strides = [1, 1]} : vector<8x128xf32> to vector<8x32xf32>
    %51 = arith.mulf %48, %33 : vector<8x32xf32>
    %52 = arith.mulf %47, %50 : vector<8x32xf32>
    %53 = arith.addf %51, %52 : vector<8x32xf32>
    %54 = math.tanh %53 : vector<8x32xf32>
    %55 = arith.mulf %49, %54 : vector<8x32xf32>
    %cst_18 = arith.constant dense<0.000000e+00> : vector<8x128xf32>
    %56 = tpu.matmul %55, %15, %cst_18 {dimension_numbers = #tpu.dot_dimension_numbers<[1], [0], [0], [1], [0, 0, 1, 1], [], []>} : vector<8x32xf32>, vector<32x128xf32>, vector<8x128xf32> -> vector<8x128xf32>
    %57 = vector.broadcast %16 : vector<1x128xf32> to vector<8x128xf32>
    %58 = arith.addf %56, %57 : vector<8x128xf32>
    %cst_19 = arith.constant dense<0.000000e+00> : vector<8x128xf32>
    %59 = tpu.matmul %55, %14, %cst_19 {dimension_numbers = #tpu.dot_dimension_numbers<[1], [0], [0], [1], [0, 0, 1, 1], [], []>} : vector<8x32xf32>, vector<32x128xf32>, vector<8x128xf32> -> vector<8x128xf32>
    %60 = arith.addf %59, %8 : vector<8x128xf32>
    %61 = arith.negf %60 : vector<8x128xf32>
    %62 = math.exp %61 : vector<8x128xf32>
    %cst_20 = arith.constant 1.000000e+00 : f32
    %63 = vector.broadcast %cst_20 : f32 to vector<8x128xf32>
    %64 = arith.addf %63, %62 : vector<8x128xf32>
    %65 = arith.divf %63, %64 : vector<8x128xf32>
    %66 = math.tanh %60 : vector<8x128xf32>
    %67 = vector.extract_strided_slice %65 {offsets = [0, 0], sizes = [8, 32], strides = [1, 1]} : vector<8x128xf32> to vector<8x32xf32>
    %68 = vector.extract_strided_slice %65 {offsets = [0, 32], sizes = [8, 32], strides = [1, 1]} : vector<8x128xf32> to vector<8x32xf32>
    %69 = vector.extract_strided_slice %65 {offsets = [0, 64], sizes = [8, 32], strides = [1, 1]} : vector<8x128xf32> to vector<8x32xf32>
    %70 = vector.extract_strided_slice %66 {offsets = [0, 96], sizes = [8, 32], strides = [1, 1]} : vector<8x128xf32> to vector<8x32xf32>
    %71 = arith.mulf %68, %53 : vector<8x32xf32>
    %72 = arith.mulf %67, %70 : vector<8x32xf32>
    %73 = arith.addf %71, %72 : vector<8x32xf32>
    %74 = math.tanh %73 : vector<8x32xf32>
    %75 = arith.mulf %69, %74 : vector<8x32xf32>
    %cst_21 = arith.constant dense<0.000000e+00> : vector<8x128xf32>
    %76 = tpu.matmul %75, %15, %cst_21 {dimension_numbers = #tpu.dot_dimension_numbers<[1], [0], [0], [1], [0, 0, 1, 1], [], []>} : vector<8x32xf32>, vector<32x128xf32>, vector<8x128xf32> -> vector<8x128xf32>
    %77 = vector.broadcast %16 : vector<1x128xf32> to vector<8x128xf32>
    %78 = arith.addf %76, %77 : vector<8x128xf32>
    %cst_22 = arith.constant dense<0.000000e+00> : vector<8x128xf32>
    %79 = tpu.matmul %75, %14, %cst_22 {dimension_numbers = #tpu.dot_dimension_numbers<[1], [0], [0], [1], [0, 0, 1, 1], [], []>} : vector<8x32xf32>, vector<32x128xf32>, vector<8x128xf32> -> vector<8x128xf32>
    %80 = arith.addf %79, %9 : vector<8x128xf32>
    %81 = arith.negf %80 : vector<8x128xf32>
    %82 = math.exp %81 : vector<8x128xf32>
    %cst_23 = arith.constant 1.000000e+00 : f32
    %83 = vector.broadcast %cst_23 : f32 to vector<8x128xf32>
    %84 = arith.addf %83, %82 : vector<8x128xf32>
    %85 = arith.divf %83, %84 : vector<8x128xf32>
    %86 = math.tanh %80 : vector<8x128xf32>
    %87 = vector.extract_strided_slice %85 {offsets = [0, 0], sizes = [8, 32], strides = [1, 1]} : vector<8x128xf32> to vector<8x32xf32>
    %88 = vector.extract_strided_slice %85 {offsets = [0, 32], sizes = [8, 32], strides = [1, 1]} : vector<8x128xf32> to vector<8x32xf32>
    %89 = vector.extract_strided_slice %85 {offsets = [0, 64], sizes = [8, 32], strides = [1, 1]} : vector<8x128xf32> to vector<8x32xf32>
    %90 = vector.extract_strided_slice %86 {offsets = [0, 96], sizes = [8, 32], strides = [1, 1]} : vector<8x128xf32> to vector<8x32xf32>
    %91 = arith.mulf %88, %73 : vector<8x32xf32>
    %92 = arith.mulf %87, %90 : vector<8x32xf32>
    %93 = arith.addf %91, %92 : vector<8x32xf32>
    %94 = math.tanh %93 : vector<8x32xf32>
    %95 = arith.mulf %89, %94 : vector<8x32xf32>
    %cst_24 = arith.constant dense<0.000000e+00> : vector<8x128xf32>
    %96 = tpu.matmul %95, %15, %cst_24 {dimension_numbers = #tpu.dot_dimension_numbers<[1], [0], [0], [1], [0, 0, 1, 1], [], []>} : vector<8x32xf32>, vector<32x128xf32>, vector<8x128xf32> -> vector<8x128xf32>
    %97 = vector.broadcast %16 : vector<1x128xf32> to vector<8x128xf32>
    %98 = arith.addf %96, %97 : vector<8x128xf32>
    %cst_25 = arith.constant dense<0.000000e+00> : vector<8x128xf32>
    %99 = tpu.matmul %95, %14, %cst_25 {dimension_numbers = #tpu.dot_dimension_numbers<[1], [0], [0], [1], [0, 0, 1, 1], [], []>} : vector<8x32xf32>, vector<32x128xf32>, vector<8x128xf32> -> vector<8x128xf32>
    %100 = arith.addf %99, %10 : vector<8x128xf32>
    %101 = arith.negf %100 : vector<8x128xf32>
    %102 = math.exp %101 : vector<8x128xf32>
    %cst_26 = arith.constant 1.000000e+00 : f32
    %103 = vector.broadcast %cst_26 : f32 to vector<8x128xf32>
    %104 = arith.addf %103, %102 : vector<8x128xf32>
    %105 = arith.divf %103, %104 : vector<8x128xf32>
    %106 = math.tanh %100 : vector<8x128xf32>
    %107 = vector.extract_strided_slice %105 {offsets = [0, 0], sizes = [8, 32], strides = [1, 1]} : vector<8x128xf32> to vector<8x32xf32>
    %108 = vector.extract_strided_slice %105 {offsets = [0, 32], sizes = [8, 32], strides = [1, 1]} : vector<8x128xf32> to vector<8x32xf32>
    %109 = vector.extract_strided_slice %105 {offsets = [0, 64], sizes = [8, 32], strides = [1, 1]} : vector<8x128xf32> to vector<8x32xf32>
    %110 = vector.extract_strided_slice %106 {offsets = [0, 96], sizes = [8, 32], strides = [1, 1]} : vector<8x128xf32> to vector<8x32xf32>
    %111 = arith.mulf %108, %93 : vector<8x32xf32>
    %112 = arith.mulf %107, %110 : vector<8x32xf32>
    %113 = arith.addf %111, %112 : vector<8x32xf32>
    %114 = math.tanh %113 : vector<8x32xf32>
    %115 = arith.mulf %109, %114 : vector<8x32xf32>
    %cst_27 = arith.constant dense<0.000000e+00> : vector<8x128xf32>
    %116 = tpu.matmul %115, %15, %cst_27 {dimension_numbers = #tpu.dot_dimension_numbers<[1], [0], [0], [1], [0, 0, 1, 1], [], []>} : vector<8x32xf32>, vector<32x128xf32>, vector<8x128xf32> -> vector<8x128xf32>
    %117 = vector.broadcast %16 : vector<1x128xf32> to vector<8x128xf32>
    %118 = arith.addf %116, %117 : vector<8x128xf32>
    %cst_28 = arith.constant dense<0.000000e+00> : vector<8x128xf32>
    %119 = tpu.matmul %115, %14, %cst_28 {dimension_numbers = #tpu.dot_dimension_numbers<[1], [0], [0], [1], [0, 0, 1, 1], [], []>} : vector<8x32xf32>, vector<32x128xf32>, vector<8x128xf32> -> vector<8x128xf32>
    %120 = arith.addf %119, %11 : vector<8x128xf32>
    %121 = arith.negf %120 : vector<8x128xf32>
    %122 = math.exp %121 : vector<8x128xf32>
    %cst_29 = arith.constant 1.000000e+00 : f32
    %123 = vector.broadcast %cst_29 : f32 to vector<8x128xf32>
    %124 = arith.addf %123, %122 : vector<8x128xf32>
    %125 = arith.divf %123, %124 : vector<8x128xf32>
    %126 = math.tanh %120 : vector<8x128xf32>
    %127 = vector.extract_strided_slice %125 {offsets = [0, 0], sizes = [8, 32], strides = [1, 1]} : vector<8x128xf32> to vector<8x32xf32>
    %128 = vector.extract_strided_slice %125 {offsets = [0, 32], sizes = [8, 32], strides = [1, 1]} : vector<8x128xf32> to vector<8x32xf32>
    %129 = vector.extract_strided_slice %125 {offsets = [0, 64], sizes = [8, 32], strides = [1, 1]} : vector<8x128xf32> to vector<8x32xf32>
    %130 = vector.extract_strided_slice %126 {offsets = [0, 96], sizes = [8, 32], strides = [1, 1]} : vector<8x128xf32> to vector<8x32xf32>
    %131 = arith.mulf %128, %113 : vector<8x32xf32>
    %132 = arith.mulf %127, %130 : vector<8x32xf32>
    %133 = arith.addf %131, %132 : vector<8x32xf32>
    %134 = math.tanh %133 : vector<8x32xf32>
    %135 = arith.mulf %129, %134 : vector<8x32xf32>
    %cst_30 = arith.constant dense<0.000000e+00> : vector<8x128xf32>
    %136 = tpu.matmul %135, %15, %cst_30 {dimension_numbers = #tpu.dot_dimension_numbers<[1], [0], [0], [1], [0, 0, 1, 1], [], []>} : vector<8x32xf32>, vector<32x128xf32>, vector<8x128xf32> -> vector<8x128xf32>
    %137 = vector.broadcast %16 : vector<1x128xf32> to vector<8x128xf32>
    %138 = arith.addf %136, %137 : vector<8x128xf32>
    %cst_31 = arith.constant dense<0.000000e+00> : vector<8x128xf32>
    %139 = tpu.matmul %135, %14, %cst_31 {dimension_numbers = #tpu.dot_dimension_numbers<[1], [0], [0], [1], [0, 0, 1, 1], [], []>} : vector<8x32xf32>, vector<32x128xf32>, vector<8x128xf32> -> vector<8x128xf32>
    %140 = arith.addf %139, %12 : vector<8x128xf32>
    %141 = arith.negf %140 : vector<8x128xf32>
    %142 = math.exp %141 : vector<8x128xf32>
    %cst_32 = arith.constant 1.000000e+00 : f32
    %143 = vector.broadcast %cst_32 : f32 to vector<8x128xf32>
    %144 = arith.addf %143, %142 : vector<8x128xf32>
    %145 = arith.divf %143, %144 : vector<8x128xf32>
    %146 = math.tanh %140 : vector<8x128xf32>
    %147 = vector.extract_strided_slice %145 {offsets = [0, 0], sizes = [8, 32], strides = [1, 1]} : vector<8x128xf32> to vector<8x32xf32>
    %148 = vector.extract_strided_slice %145 {offsets = [0, 32], sizes = [8, 32], strides = [1, 1]} : vector<8x128xf32> to vector<8x32xf32>
    %149 = vector.extract_strided_slice %145 {offsets = [0, 64], sizes = [8, 32], strides = [1, 1]} : vector<8x128xf32> to vector<8x32xf32>
    %150 = vector.extract_strided_slice %146 {offsets = [0, 96], sizes = [8, 32], strides = [1, 1]} : vector<8x128xf32> to vector<8x32xf32>
    %151 = arith.mulf %148, %133 : vector<8x32xf32>
    %152 = arith.mulf %147, %150 : vector<8x32xf32>
    %153 = arith.addf %151, %152 : vector<8x32xf32>
    %154 = math.tanh %153 : vector<8x32xf32>
    %155 = arith.mulf %149, %154 : vector<8x32xf32>
    %cst_33 = arith.constant dense<0.000000e+00> : vector<8x128xf32>
    %156 = tpu.matmul %155, %15, %cst_33 {dimension_numbers = #tpu.dot_dimension_numbers<[1], [0], [0], [1], [0, 0, 1, 1], [], []>} : vector<8x32xf32>, vector<32x128xf32>, vector<8x128xf32> -> vector<8x128xf32>
    %157 = vector.broadcast %16 : vector<1x128xf32> to vector<8x128xf32>
    %158 = arith.addf %156, %157 : vector<8x128xf32>
    %cst_34 = arith.constant dense<0.000000e+00> : vector<8x128xf32>
    %159 = tpu.matmul %155, %14, %cst_34 {dimension_numbers = #tpu.dot_dimension_numbers<[1], [0], [0], [1], [0, 0, 1, 1], [], []>} : vector<8x32xf32>, vector<32x128xf32>, vector<8x128xf32> -> vector<8x128xf32>
    %160 = arith.addf %159, %13 : vector<8x128xf32>
    %161 = arith.negf %160 : vector<8x128xf32>
    %162 = math.exp %161 : vector<8x128xf32>
    %cst_35 = arith.constant 1.000000e+00 : f32
    %163 = vector.broadcast %cst_35 : f32 to vector<8x128xf32>
    %164 = arith.addf %163, %162 : vector<8x128xf32>
    %165 = arith.divf %163, %164 : vector<8x128xf32>
    %166 = math.tanh %160 : vector<8x128xf32>
    %167 = vector.extract_strided_slice %165 {offsets = [0, 0], sizes = [8, 32], strides = [1, 1]} : vector<8x128xf32> to vector<8x32xf32>
    %168 = vector.extract_strided_slice %165 {offsets = [0, 32], sizes = [8, 32], strides = [1, 1]} : vector<8x128xf32> to vector<8x32xf32>
    %169 = vector.extract_strided_slice %165 {offsets = [0, 64], sizes = [8, 32], strides = [1, 1]} : vector<8x128xf32> to vector<8x32xf32>
    %170 = vector.extract_strided_slice %166 {offsets = [0, 96], sizes = [8, 32], strides = [1, 1]} : vector<8x128xf32> to vector<8x32xf32>
    %171 = arith.mulf %168, %153 : vector<8x32xf32>
    %172 = arith.mulf %167, %170 : vector<8x32xf32>
    %173 = arith.addf %171, %172 : vector<8x32xf32>
    %174 = math.tanh %173 : vector<8x32xf32>
    %175 = arith.mulf %169, %174 : vector<8x32xf32>
    %cst_36 = arith.constant dense<0.000000e+00> : vector<8x128xf32>
    %176 = tpu.matmul %175, %15, %cst_36 {dimension_numbers = #tpu.dot_dimension_numbers<[1], [0], [0], [1], [0, 0, 1, 1], [], []>} : vector<8x32xf32>, vector<32x128xf32>, vector<8x128xf32> -> vector<8x128xf32>
    %177 = vector.broadcast %16 : vector<1x128xf32> to vector<8x128xf32>
    %178 = arith.addf %176, %177 : vector<8x128xf32>
    %c0_37 = arith.constant 0 : index
    %c0_38 = arith.constant 0 : index
    %179 = vector.load %arg5[%c0_37, %c0_38] : memref<32x128xf32, #tpu.memory_space<vmem>>, vector<32x128xf32>
    %cst_39 = arith.constant dense<0.000000e+00> : vector<8x128xf32>
    %180 = tpu.matmul %175, %179, %cst_39 {dimension_numbers = #tpu.dot_dimension_numbers<[1], [0], [0], [1], [0, 0, 1, 1], [], []>} : vector<8x32xf32>, vector<32x128xf32>, vector<8x128xf32> -> vector<8x128xf32>
    %181 = arith.addf %180, %38 : vector<8x128xf32>
    %182 = arith.negf %181 : vector<8x128xf32>
    %183 = math.exp %182 : vector<8x128xf32>
    %cst_40 = arith.constant 1.000000e+00 : f32
    %184 = vector.broadcast %cst_40 : f32 to vector<8x128xf32>
    %185 = arith.addf %184, %183 : vector<8x128xf32>
    %186 = arith.divf %184, %185 : vector<8x128xf32>
    %187 = math.tanh %181 : vector<8x128xf32>
    %188 = vector.extract_strided_slice %186 {offsets = [0, 0], sizes = [8, 32], strides = [1, 1]} : vector<8x128xf32> to vector<8x32xf32>
    %189 = vector.extract_strided_slice %186 {offsets = [0, 32], sizes = [8, 32], strides = [1, 1]} : vector<8x128xf32> to vector<8x32xf32>
    %190 = vector.extract_strided_slice %186 {offsets = [0, 64], sizes = [8, 32], strides = [1, 1]} : vector<8x128xf32> to vector<8x32xf32>
    %191 = vector.extract_strided_slice %187 {offsets = [0, 96], sizes = [8, 32], strides = [1, 1]} : vector<8x128xf32> to vector<8x32xf32>
    %192 = arith.mulf %189, %173 : vector<8x32xf32>
    %193 = arith.mulf %188, %191 : vector<8x32xf32>
    %194 = arith.addf %192, %193 : vector<8x32xf32>
    %195 = math.tanh %194 : vector<8x32xf32>
    %196 = arith.mulf %190, %195 : vector<8x32xf32>
    %cst_41 = arith.constant dense<0.000000e+00> : vector<8x128xf32>
    %197 = tpu.matmul %196, %179, %cst_41 {dimension_numbers = #tpu.dot_dimension_numbers<[1], [0], [0], [1], [0, 0, 1, 1], [], []>} : vector<8x32xf32>, vector<32x128xf32>, vector<8x128xf32> -> vector<8x128xf32>
    %198 = arith.addf %197, %58 : vector<8x128xf32>
    %199 = arith.negf %198 : vector<8x128xf32>
    %200 = math.exp %199 : vector<8x128xf32>
    %cst_42 = arith.constant 1.000000e+00 : f32
    %201 = vector.broadcast %cst_42 : f32 to vector<8x128xf32>
    %202 = arith.addf %201, %200 : vector<8x128xf32>
    %203 = arith.divf %201, %202 : vector<8x128xf32>
    %204 = math.tanh %198 : vector<8x128xf32>
    %205 = vector.extract_strided_slice %203 {offsets = [0, 0], sizes = [8, 32], strides = [1, 1]} : vector<8x128xf32> to vector<8x32xf32>
    %206 = vector.extract_strided_slice %203 {offsets = [0, 32], sizes = [8, 32], strides = [1, 1]} : vector<8x128xf32> to vector<8x32xf32>
    %207 = vector.extract_strided_slice %203 {offsets = [0, 64], sizes = [8, 32], strides = [1, 1]} : vector<8x128xf32> to vector<8x32xf32>
    %208 = vector.extract_strided_slice %204 {offsets = [0, 96], sizes = [8, 32], strides = [1, 1]} : vector<8x128xf32> to vector<8x32xf32>
    %209 = arith.mulf %206, %194 : vector<8x32xf32>
    %210 = arith.mulf %205, %208 : vector<8x32xf32>
    %211 = arith.addf %209, %210 : vector<8x32xf32>
    %212 = math.tanh %211 : vector<8x32xf32>
    %213 = arith.mulf %207, %212 : vector<8x32xf32>
    %cst_43 = arith.constant dense<0.000000e+00> : vector<8x128xf32>
    %214 = tpu.matmul %213, %179, %cst_43 {dimension_numbers = #tpu.dot_dimension_numbers<[1], [0], [0], [1], [0, 0, 1, 1], [], []>} : vector<8x32xf32>, vector<32x128xf32>, vector<8x128xf32> -> vector<8x128xf32>
    %215 = arith.addf %214, %78 : vector<8x128xf32>
    %216 = arith.negf %215 : vector<8x128xf32>
    %217 = math.exp %216 : vector<8x128xf32>
    %cst_44 = arith.constant 1.000000e+00 : f32
    %218 = vector.broadcast %cst_44 : f32 to vector<8x128xf32>
    %219 = arith.addf %218, %217 : vector<8x128xf32>
    %220 = arith.divf %218, %219 : vector<8x128xf32>
    %221 = math.tanh %215 : vector<8x128xf32>
    %222 = vector.extract_strided_slice %220 {offsets = [0, 0], sizes = [8, 32], strides = [1, 1]} : vector<8x128xf32> to vector<8x32xf32>
    %223 = vector.extract_strided_slice %220 {offsets = [0, 32], sizes = [8, 32], strides = [1, 1]} : vector<8x128xf32> to vector<8x32xf32>
    %224 = vector.extract_strided_slice %220 {offsets = [0, 64], sizes = [8, 32], strides = [1, 1]} : vector<8x128xf32> to vector<8x32xf32>
    %225 = vector.extract_strided_slice %221 {offsets = [0, 96], sizes = [8, 32], strides = [1, 1]} : vector<8x128xf32> to vector<8x32xf32>
    %226 = arith.mulf %223, %211 : vector<8x32xf32>
    %227 = arith.mulf %222, %225 : vector<8x32xf32>
    %228 = arith.addf %226, %227 : vector<8x32xf32>
    %229 = math.tanh %228 : vector<8x32xf32>
    %230 = arith.mulf %224, %229 : vector<8x32xf32>
    %cst_45 = arith.constant dense<0.000000e+00> : vector<8x128xf32>
    %231 = tpu.matmul %230, %179, %cst_45 {dimension_numbers = #tpu.dot_dimension_numbers<[1], [0], [0], [1], [0, 0, 1, 1], [], []>} : vector<8x32xf32>, vector<32x128xf32>, vector<8x128xf32> -> vector<8x128xf32>
    %232 = arith.addf %231, %98 : vector<8x128xf32>
    %233 = arith.negf %232 : vector<8x128xf32>
    %234 = math.exp %233 : vector<8x128xf32>
    %cst_46 = arith.constant 1.000000e+00 : f32
    %235 = vector.broadcast %cst_46 : f32 to vector<8x128xf32>
    %236 = arith.addf %235, %234 : vector<8x128xf32>
    %237 = arith.divf %235, %236 : vector<8x128xf32>
    %238 = math.tanh %232 : vector<8x128xf32>
    %239 = vector.extract_strided_slice %237 {offsets = [0, 0], sizes = [8, 32], strides = [1, 1]} : vector<8x128xf32> to vector<8x32xf32>
    %240 = vector.extract_strided_slice %237 {offsets = [0, 32], sizes = [8, 32], strides = [1, 1]} : vector<8x128xf32> to vector<8x32xf32>
    %241 = vector.extract_strided_slice %237 {offsets = [0, 64], sizes = [8, 32], strides = [1, 1]} : vector<8x128xf32> to vector<8x32xf32>
    %242 = vector.extract_strided_slice %238 {offsets = [0, 96], sizes = [8, 32], strides = [1, 1]} : vector<8x128xf32> to vector<8x32xf32>
    %243 = arith.mulf %240, %228 : vector<8x32xf32>
    %244 = arith.mulf %239, %242 : vector<8x32xf32>
    %245 = arith.addf %243, %244 : vector<8x32xf32>
    %246 = math.tanh %245 : vector<8x32xf32>
    %247 = arith.mulf %241, %246 : vector<8x32xf32>
    %cst_47 = arith.constant dense<0.000000e+00> : vector<8x128xf32>
    %248 = tpu.matmul %247, %179, %cst_47 {dimension_numbers = #tpu.dot_dimension_numbers<[1], [0], [0], [1], [0, 0, 1, 1], [], []>} : vector<8x32xf32>, vector<32x128xf32>, vector<8x128xf32> -> vector<8x128xf32>
    %249 = arith.addf %248, %118 : vector<8x128xf32>
    %250 = arith.negf %249 : vector<8x128xf32>
    %251 = math.exp %250 : vector<8x128xf32>
    %cst_48 = arith.constant 1.000000e+00 : f32
    %252 = vector.broadcast %cst_48 : f32 to vector<8x128xf32>
    %253 = arith.addf %252, %251 : vector<8x128xf32>
    %254 = arith.divf %252, %253 : vector<8x128xf32>
    %255 = math.tanh %249 : vector<8x128xf32>
    %256 = vector.extract_strided_slice %254 {offsets = [0, 0], sizes = [8, 32], strides = [1, 1]} : vector<8x128xf32> to vector<8x32xf32>
    %257 = vector.extract_strided_slice %254 {offsets = [0, 32], sizes = [8, 32], strides = [1, 1]} : vector<8x128xf32> to vector<8x32xf32>
    %258 = vector.extract_strided_slice %254 {offsets = [0, 64], sizes = [8, 32], strides = [1, 1]} : vector<8x128xf32> to vector<8x32xf32>
    %259 = vector.extract_strided_slice %255 {offsets = [0, 96], sizes = [8, 32], strides = [1, 1]} : vector<8x128xf32> to vector<8x32xf32>
    %260 = arith.mulf %257, %245 : vector<8x32xf32>
    %261 = arith.mulf %256, %259 : vector<8x32xf32>
    %262 = arith.addf %260, %261 : vector<8x32xf32>
    %263 = math.tanh %262 : vector<8x32xf32>
    %264 = arith.mulf %258, %263 : vector<8x32xf32>
    %cst_49 = arith.constant dense<0.000000e+00> : vector<8x128xf32>
    %265 = tpu.matmul %264, %179, %cst_49 {dimension_numbers = #tpu.dot_dimension_numbers<[1], [0], [0], [1], [0, 0, 1, 1], [], []>} : vector<8x32xf32>, vector<32x128xf32>, vector<8x128xf32> -> vector<8x128xf32>
    %266 = arith.addf %265, %138 : vector<8x128xf32>
    %267 = arith.negf %266 : vector<8x128xf32>
    %268 = math.exp %267 : vector<8x128xf32>
    %cst_50 = arith.constant 1.000000e+00 : f32
    %269 = vector.broadcast %cst_50 : f32 to vector<8x128xf32>
    %270 = arith.addf %269, %268 : vector<8x128xf32>
    %271 = arith.divf %269, %270 : vector<8x128xf32>
    %272 = math.tanh %266 : vector<8x128xf32>
    %273 = vector.extract_strided_slice %271 {offsets = [0, 0], sizes = [8, 32], strides = [1, 1]} : vector<8x128xf32> to vector<8x32xf32>
    %274 = vector.extract_strided_slice %271 {offsets = [0, 32], sizes = [8, 32], strides = [1, 1]} : vector<8x128xf32> to vector<8x32xf32>
    %275 = vector.extract_strided_slice %271 {offsets = [0, 64], sizes = [8, 32], strides = [1, 1]} : vector<8x128xf32> to vector<8x32xf32>
    %276 = vector.extract_strided_slice %272 {offsets = [0, 96], sizes = [8, 32], strides = [1, 1]} : vector<8x128xf32> to vector<8x32xf32>
    %277 = arith.mulf %274, %262 : vector<8x32xf32>
    %278 = arith.mulf %273, %276 : vector<8x32xf32>
    %279 = arith.addf %277, %278 : vector<8x32xf32>
    %280 = math.tanh %279 : vector<8x32xf32>
    %281 = arith.mulf %275, %280 : vector<8x32xf32>
    %cst_51 = arith.constant dense<0.000000e+00> : vector<8x128xf32>
    %282 = tpu.matmul %281, %179, %cst_51 {dimension_numbers = #tpu.dot_dimension_numbers<[1], [0], [0], [1], [0, 0, 1, 1], [], []>} : vector<8x32xf32>, vector<32x128xf32>, vector<8x128xf32> -> vector<8x128xf32>
    %283 = arith.addf %282, %158 : vector<8x128xf32>
    %284 = arith.negf %283 : vector<8x128xf32>
    %285 = math.exp %284 : vector<8x128xf32>
    %cst_52 = arith.constant 1.000000e+00 : f32
    %286 = vector.broadcast %cst_52 : f32 to vector<8x128xf32>
    %287 = arith.addf %286, %285 : vector<8x128xf32>
    %288 = arith.divf %286, %287 : vector<8x128xf32>
    %289 = math.tanh %283 : vector<8x128xf32>
    %290 = vector.extract_strided_slice %288 {offsets = [0, 0], sizes = [8, 32], strides = [1, 1]} : vector<8x128xf32> to vector<8x32xf32>
    %291 = vector.extract_strided_slice %288 {offsets = [0, 32], sizes = [8, 32], strides = [1, 1]} : vector<8x128xf32> to vector<8x32xf32>
    %292 = vector.extract_strided_slice %288 {offsets = [0, 64], sizes = [8, 32], strides = [1, 1]} : vector<8x128xf32> to vector<8x32xf32>
    %293 = vector.extract_strided_slice %289 {offsets = [0, 96], sizes = [8, 32], strides = [1, 1]} : vector<8x128xf32> to vector<8x32xf32>
    %294 = arith.mulf %291, %279 : vector<8x32xf32>
    %295 = arith.mulf %290, %293 : vector<8x32xf32>
    %296 = arith.addf %294, %295 : vector<8x32xf32>
    %297 = math.tanh %296 : vector<8x32xf32>
    %298 = arith.mulf %292, %297 : vector<8x32xf32>
    %cst_53 = arith.constant dense<0.000000e+00> : vector<8x128xf32>
    %299 = tpu.matmul %298, %179, %cst_53 {dimension_numbers = #tpu.dot_dimension_numbers<[1], [0], [0], [1], [0, 0, 1, 1], [], []>} : vector<8x32xf32>, vector<32x128xf32>, vector<8x128xf32> -> vector<8x128xf32>
    %300 = arith.addf %299, %178 : vector<8x128xf32>
    %301 = arith.negf %300 : vector<8x128xf32>
    %302 = math.exp %301 : vector<8x128xf32>
    %cst_54 = arith.constant 1.000000e+00 : f32
    %303 = vector.broadcast %cst_54 : f32 to vector<8x128xf32>
    %304 = arith.addf %303, %302 : vector<8x128xf32>
    %305 = arith.divf %303, %304 : vector<8x128xf32>
    %306 = math.tanh %300 : vector<8x128xf32>
    %307 = vector.extract_strided_slice %305 {offsets = [0, 0], sizes = [8, 32], strides = [1, 1]} : vector<8x128xf32> to vector<8x32xf32>
    %308 = vector.extract_strided_slice %305 {offsets = [0, 32], sizes = [8, 32], strides = [1, 1]} : vector<8x128xf32> to vector<8x32xf32>
    %309 = vector.extract_strided_slice %305 {offsets = [0, 64], sizes = [8, 32], strides = [1, 1]} : vector<8x128xf32> to vector<8x32xf32>
    %310 = vector.extract_strided_slice %306 {offsets = [0, 96], sizes = [8, 32], strides = [1, 1]} : vector<8x128xf32> to vector<8x32xf32>
    %311 = arith.mulf %308, %296 : vector<8x32xf32>
    %312 = arith.mulf %307, %310 : vector<8x32xf32>
    %313 = arith.addf %311, %312 : vector<8x32xf32>
    %314 = math.tanh %313 : vector<8x32xf32>
    %315 = arith.mulf %309, %314 : vector<8x32xf32>
    %c0_55 = arith.constant 0 : index
    %c0_56 = arith.constant 0 : index
    %316 = vector.load %arg7[%c0_55, %c0_56] : memref<32x128xf32, #tpu.memory_space<vmem>>, vector<32x128xf32>
    %cst_57 = arith.constant dense<0.000000e+00> : vector<8x128xf32>
    %317 = tpu.matmul %315, %316, %cst_57 {dimension_numbers = #tpu.dot_dimension_numbers<[1], [0], [0], [1], [0, 0, 1, 1], [], []>} : vector<8x32xf32>, vector<32x128xf32>, vector<8x128xf32> -> vector<8x128xf32>
    %c0_58 = arith.constant 0 : index
    %c0_59 = arith.constant 0 : index
    %318 = vector.load %arg8[%c0_58, %c0_59] : memref<1x128xf32, #tpu.memory_space<vmem>>, vector<1x128xf32>
    %319 = vector.broadcast %318 : vector<1x128xf32> to vector<8x128xf32>
    %320 = arith.addf %317, %319 : vector<8x128xf32>
    %cst_60 = arith.constant 0.000000e+00 : f32
    %321 = vector.broadcast %cst_60 : f32 to vector<8x128xf32>
    %322 = arith.maximumf %320, %321 : vector<8x128xf32>
    %c0_61 = arith.constant 0 : index
    %c0_62 = arith.constant 0 : index
    %323 = vector.load %arg9[%c0_61, %c0_62] : memref<128x128xf32, #tpu.memory_space<vmem>>, vector<128x128xf32>
    %cst_63 = arith.constant dense<0.000000e+00> : vector<8x128xf32>
    %324 = tpu.matmul %322, %323, %cst_63 {dimension_numbers = #tpu.dot_dimension_numbers<[1], [0], [0], [1], [0, 0, 1, 1], [], []>} : vector<8x128xf32>, vector<128x128xf32>, vector<8x128xf32> -> vector<8x128xf32>
    %c0_64 = arith.constant 0 : index
    %c0_65 = arith.constant 0 : index
    %325 = vector.load %arg10[%c0_64, %c0_65] : memref<1x128xf32, #tpu.memory_space<vmem>>, vector<1x128xf32>
    %326 = vector.broadcast %325 : vector<1x128xf32> to vector<8x128xf32>
    %327 = arith.addf %324, %326 : vector<8x128xf32>
    %cst_66 = arith.constant 0.000000e+00 : f32
    %328 = vector.broadcast %cst_66 : f32 to vector<8x128xf32>
    %329 = arith.maximumf %327, %328 : vector<8x128xf32>
    %c0_67 = arith.constant 0 : index
    %c0_68 = arith.constant 0 : index
    %330 = vector.load %arg11[%c0_67, %c0_68] : memref<128x128xf32, #tpu.memory_space<vmem>>, vector<128x128xf32>
    %cst_69 = arith.constant dense<0.000000e+00> : vector<8x128xf32>
    %331 = tpu.matmul %329, %330, %cst_69 {dimension_numbers = #tpu.dot_dimension_numbers<[1], [0], [0], [1], [0, 0, 1, 1], [], []>} : vector<8x128xf32>, vector<128x128xf32>, vector<8x128xf32> -> vector<8x128xf32>
    %c0_70 = arith.constant 0 : index
    %c0_71 = arith.constant 0 : index
    %332 = vector.load %arg12[%c0_70, %c0_71] : memref<1x128xf32, #tpu.memory_space<vmem>>, vector<1x128xf32>
    %333 = vector.broadcast %332 : vector<1x128xf32> to vector<8x128xf32>
    %334 = arith.addf %331, %333 : vector<8x128xf32>
    %c0_72 = arith.constant 0 : index
    %c0_73 = arith.constant 0 : index
    %335 = vector.load %arg13[%c0_72, %c0_73] : memref<8x128xf32, #tpu.memory_space<vmem>>, vector<8x128xf32>
    tpu.vector_store %arg13[%c0_72, %c0_73], %334 {strides = array<i32>} : memref<8x128xf32, #tpu.memory_space<vmem>>, vector<8x128xf32>,
    return
  }
}

</mosaic_0001>

<llo_original>
// kernel: tpu_custom_call.1
$region0: #{tpu_custom_call.1}
  #allocation0 [shape = 'u32[]', space=smem, size = 0x4, offset = 0x4, fixed_abs, tag = 'smem constant byte address 0x4 - core index']
  #allocation1 [shape = 'u32[72,128]{1,0:T(1,128)}', space=vmem, size = 0x9000, scoped, tag = 'internal scratch']
  %s0 = inlined_call_operand.vmem [shape: f32[64,8], index: 0, kind: input, shape index: {}]
  %s1 = inlined_call_operand.vmem [shape: f32[8,128], index: 1, kind: input, shape index: {}]
  %s2 = inlined_call_operand.vmem [shape: f32[32,128], index: 2, kind: input, shape index: {}]
  %s3 = inlined_call_operand.vmem [shape: f32[1,128], index: 3, kind: input, shape index: {}]
  %s4 = inlined_call_operand.vmem [shape: f32[32,128], index: 4, kind: input, shape index: {}]
  %s5 = inlined_call_operand.hbm [shape: f32[32,128], index: 5, kind: input, shape index: {}]
  %s6 = inlined_call_operand.vmem [shape: f32[1,128], index: 6, kind: input, shape index: {}]
  %s7 = inlined_call_operand.hbm [shape: f32[32,128], index: 7, kind: input, shape index: {}]
  %s8 = inlined_call_operand.vmem [shape: f32[1,128], index: 8, kind: input, shape index: {}]
  %s9 = inlined_call_operand.hbm [shape: f32[128,128], index: 9, kind: input, shape index: {}]
  %s10 = inlined_call_operand.vmem [shape: f32[1,128], index: 10, kind: input, shape index: {}]
  %s11 = inlined_call_operand.hbm [shape: f32[128,128], index: 11, kind: input, shape index: {}]
  %s12 = inlined_call_operand.vmem [shape: f32[1,128], index: 12, kind: input, shape index: {}]
  %s13 = inlined_call_operand.hbm [shape: f32[8,128], index: 13, kind: output, shape index: {}]
  %s14 = sld [smem:[#allocation0]]
  $region78: #{tpu_custom_call.1} parent=0
    _
  %s16 = ssub.s32 1, %s14
  %s17 = scalar_select 0, %s16, %s14
  $region1: #{tpu_custom_call.1} parent=0
    #allocation2 [shape = 'u8[16384]{0}', space=vmem, size = 0x4000, scoped, tag = 'input window, operand 5, single buffered']
    #allocation3 [shape = 's32[1]{0}', space=sflag, size = 0x4, scoped, tag = 'scoped memory for tpu_custom_call.1']
    #allocation4 [shape = 's32[1]{0}', space=sflag, size = 0x4, scoped, tag = 'scoped memory for tpu_custom_call.1']
    #allocation5 [shape = 'u8[16384]{0}', space=vmem, size = 0x4000, scoped, tag = 'input window, operand 7, single buffered']
    #allocation6 [shape = 's32[1]{0}', space=sflag, size = 0x4, scoped, tag = 'scoped memory for tpu_custom_call.1']
    #allocation7 [shape = 'u8[65536]{0}', space=vmem, size = 0x10000, scoped, tag = 'input window, operand 9, single buffered']
    #allocation8 [shape = 'u8[65536]{0}', space=vmem, size = 0x10000, scoped, tag = 'input window, operand 11, single buffered']
    #allocation9 [shape = 's32[1]{0}', space=sflag, size = 0x4, scoped, tag = 'scoped memory for tpu_custom_call.1']
    #allocation10 [shape = 'u8[4096]{0}', space=vmem, size = 0x1000, scoped, tag = 'output window, operand 0, single buffered']
    %18 = vsyncpa [#allocation3], 0
    %19 = vsyncpa [#allocation6], 0
    %20 = vsyncpa [#allocation9], 0
    %21 = vsyncpa [#allocation4], 0
    // Predicated region
    $region2: #{tpu_custom_call.1} parent=1 // pred_check
      _
    $region3: #{tpu_custom_call.1} parent=1 // pred_check_branch
      %23 = sbr.rel (0) target = $region5
    $region4: #{tpu_custom_call.1} parent=1 // pred_region
      _
    $region5: #{tpu_custom_call.1} parent=1 // pred_fallthru
      _
    // Predicated region
    $region6: #{tpu_custom_call.1} parent=1 // pred_check
      _
    $region7: #{tpu_custom_call.1} parent=1 // pred_check_branch
      %25 = sbr.rel (0) target = $region9
    $region8: #{tpu_custom_call.1} parent=1 // pred_region
      _
    $region9: #{tpu_custom_call.1} parent=1 // pred_fallthru
      _
    // Predicated region
    $region10: #{tpu_custom_call.1} parent=1 // pred_check
      _
    $region11: #{tpu_custom_call.1} parent=1 // pred_check_branch
      %27 = sbr.rel (0) target = $region13
    $region12: #{tpu_custom_call.1} parent=1 // pred_region
      _
    $region13: #{tpu_custom_call.1} parent=1 // pred_fallthru
      _
    // Predicated region
    $region14: #{tpu_custom_call.1} parent=1 // pred_check
      _
    $region15: #{tpu_custom_call.1} parent=1 // pred_check_branch
      %29 = sbr.rel (0) target = $region17
    $region16: #{tpu_custom_call.1} parent=1 // pred_region
      _
    $region17: #{tpu_custom_call.1} parent=1 // pred_fallthru
      _
    // Predicated region
    $region18: #{tpu_custom_call.1} parent=1 // pred_check
      _
    $region19: #{tpu_custom_call.1} parent=1 // pred_check_branch
      %31 = sbr.rel (0) target = $region21
    $region20: #{tpu_custom_call.1} parent=1 // pred_region
      _
    $region21: #{tpu_custom_call.1} parent=1 // pred_fallthru
      _
    // Predicated region
    $region22: #{tpu_custom_call.1} parent=1 // pred_check
      _
    $region23: #{tpu_custom_call.1} parent=1 // pred_check_branch
      %33 = sbr.rel (0) target = $region25
    $region24: #{tpu_custom_call.1} parent=1 // pred_region
      %35 = vsyncadd [#allocation3], 0
      %s36 = sshll.u32 %s5, 4
      %s37 = int_to_ptr.hbm [resolvable:$true] %s36
      %s38 = sshll.u32 [#allocation2], 4
      %s39 = int_to_ptr.vmem [resolvable:$true] %s38
      %44 = dma.hbm_to_vmem [thread:$0]  %s37, 512, %s39, [#allocation3], 128, 128, 8
    $region25: #{tpu_custom_call.1} parent=1 // pred_fallthru
      _
    // Predicated region
    $region26: #{tpu_custom_call.1} parent=1 // pred_check
      _
    $region27: #{tpu_custom_call.1} parent=1 // pred_check_branch
      %46 = sbr.rel (0) target = $region29
    $region28: #{tpu_custom_call.1} parent=1 // pred_region
      _
    $region29: #{tpu_custom_call.1} parent=1 // pred_fallthru
      _
    // Predicated region
    $region30: #{tpu_custom_call.1} parent=1 // pred_check
      _
    $region31: #{tpu_custom_call.1} parent=1 // pred_check_branch
      %48 = sbr.rel (0) target = $region33
    $region32: #{tpu_custom_call.1} parent=1 // pred_region
      %50 = vsyncadd [#allocation6], 0
      %s51 = sshll.u32 %s7, 4
      %s52 = int_to_ptr.hbm [resolvable:$true] %s51
      %s53 = sshll.u32 [#allocation5], 4
      %s54 = int_to_ptr.vmem [resolvable:$true] %s53
      %59 = dma.hbm_to_vmem [thread:$0]  %s52, 512, %s54, [#allocation6], 128, 128, 8
    $region33: #{tpu_custom_call.1} parent=1 // pred_fallthru
      _
    // Predicated region
    $region34: #{tpu_custom_call.1} parent=1 // pred_check
      _
    $region35: #{tpu_custom_call.1} parent=1 // pred_check_branch
      %61 = sbr.rel (0) target = $region37
    $region36: #{tpu_custom_call.1} parent=1 // pred_region
      _
    $region37: #{tpu_custom_call.1} parent=1 // pred_fallthru
      _
    // Predicated region
    $region38: #{tpu_custom_call.1} parent=1 // pred_check
      _
    $region39: #{tpu_custom_call.1} parent=1 // pred_check_branch
      %63 = sbr.rel (0) target = $region41
    $region40: #{tpu_custom_call.1} parent=1 // pred_region
      %65 = vsyncadd [#allocation6], 0
      %s66 = sshll.u32 %s9, 4
      %s67 = int_to_ptr.hbm [resolvable:$true] %s66
      %s68 = sshll.u32 [#allocation7], 4
      %s69 = int_to_ptr.vmem [resolvable:$true] %s68
      %74 = dma.hbm_to_vmem [thread:$0]  %s67, 2048, %s69, [#allocation6], 128, 128, 8
    $region41: #{tpu_custom_call.1} parent=1 // pred_fallthru
      _
    // Predicated region
    $region42: #{tpu_custom_call.1} parent=1 // pred_check
      _
    $region43: #{tpu_custom_call.1} parent=1 // pred_check_branch
      %76 = sbr.rel (0) target = $region45
    $region44: #{tpu_custom_call.1} parent=1 // pred_region
      _
    $region45: #{tpu_custom_call.1} parent=1 // pred_fallthru
      _
    // Predicated region
    $region46: #{tpu_custom_call.1} parent=1 // pred_check
      _
    $region47: #{tpu_custom_call.1} parent=1 // pred_check_branch
      %78 = sbr.rel (0) target = $region49
    $region48: #{tpu_custom_call.1} parent=1 // pred_region
      %80 = vsyncadd [#allocation9], 0
      %s81 = sshll.u32 %s11, 4
      %s82 = int_to_ptr.hbm [resolvable:$true] %s81
      %s83 = sshll.u32 [#allocation8], 4
      %s84 = int_to_ptr.vmem [resolvable:$true] %s83
      %89 = dma.hbm_to_vmem [thread:$0]  %s82, 2048, %s84, [#allocation9], 128, 128, 8
    $region49: #{tpu_custom_call.1} parent=1 // pred_fallthru
      _
    // Predicated region
    $region50: #{tpu_custom_call.1} parent=1 // pred_check
      _
    $region51: #{tpu_custom_call.1} parent=1 // pred_check_branch
      %91 = sbr.rel (0) target = $region53
    $region52: #{tpu_custom_call.1} parent=1 // pred_region
      _
    $region53: #{tpu_custom_call.1} parent=1 // pred_fallthru
      _
    // Predicated region
    $region54: #{tpu_custom_call.1} parent=1 // pred_check
      _
    $region55: #{tpu_custom_call.1} parent=1 // pred_check_branch
      %93 = sbr.rel (0) target = $region57
    $region56: #{tpu_custom_call.1} parent=1 // pred_region
      %95 = dma.done [#allocation3], 512
    $region57: #{tpu_custom_call.1} parent=1 // pred_fallthru
      _
    // Predicated region
    $region58: #{tpu_custom_call.1} parent=1 // pred_check
      _
    $region59: #{tpu_custom_call.1} parent=1 // pred_check_branch
      %97 = sbr.rel (0) target = $region61
    $region60: #{tpu_custom_call.1} parent=1 // pred_region
      %99 = dma.done [#allocation6], 512
    $region61: #{tpu_custom_call.1} parent=1 // pred_fallthru
      _
    // Predicated region
    $region62: #{tpu_custom_call.1} parent=1 // pred_check
      _
    $region63: #{tpu_custom_call.1} parent=1 // pred_check_branch
      %101 = sbr.rel (0) target = $region65
    $region64: #{tpu_custom_call.1} parent=1 // pred_region
      %103 = dma.done [#allocation6], 2048
    $region65: #{tpu_custom_call.1} parent=1 // pred_fallthru
      _
    // Predicated region
    $region66: #{tpu_custom_call.1} parent=1 // pred_check
      _
    $region67: #{tpu_custom_call.1} parent=1 // pred_check_branch
      %105 = sbr.rel (0) target = $region69
    $region68: #{tpu_custom_call.1} parent=1 // pred_region
      %107 = dma.done [#allocation9], 2048
    $region69: #{tpu_custom_call.1} parent=1 // pred_fallthru
      _
    %v108 = vld [vmem:[%s1] sm:$0xff]
    %v109 = vld [vmem:[%s3] sm:$0x1]
    %v110 = vld [vmem:[%s0] sm:$0xff]
    %v111 = vld [vmem:[%s0 + $0x8] sm:$0xff]
    %v112 = vld [vmem:[%s0 + $0x10] sm:$0xff]
    %v113 = vld [vmem:[%s0 + $0x18] sm:$0xff]
    %v114 = vld [vmem:[%s0 + $0x20] sm:$0xff]
    %v115 = vld [vmem:[%s0 + $0x28] sm:$0xff]
    %v116 = vld [vmem:[%s0 + $0x30] sm:$0xff]
    %v117 = vld [vmem:[%s0 + $0x38] sm:$0xff]
    %v119 = vperm.slane %v109, 0
    %vm121 = vcmask 64512
    %v123 = vsel %vm121, %v110, 0
    %v126 = vsel %vm121, %v111, 0
    %v129 = vsel %vm121, %v112, 0
    %v132 = vsel %vm121, %v113, 0
    %v135 = vsel %vm121, %v114, 0
    %v138 = vsel %vm121, %v115, 0
    %v141 = vsel %vm121, %v116, 0
    %v144 = vsel %vm121, %v117, 0
    %146 = vmatpush.msra.mxu0 0.0
    %147 = vmatpush.msra.mxu0 0.0
    %148 = vmatpush.msra.mxu0 0.0
    %149 = vmatpush.msra.mxu0 0.0
    %150 = vmatpush.msra.mxu0 0.0
    %151 = vmatpush.msra.mxu0 0.0
    %152 = vmatpush.msra.mxu0 0.0
    %153 = vmatpush.msra.mxu0 0.0
    %154 = vmatpush.msra.mxu0 0.0
    %155 = vmatpush.msra.mxu0 0.0
    %156 = vmatpush.msra.mxu0 0.0
    %157 = vmatpush.msra.mxu0 0.0
    %158 = vmatpush.msra.mxu0 0.0
    %159 = vmatpush.msra.mxu0 0.0
    %160 = vmatpush.msra.mxu0 0.0
    %161 = vmatpush.msra.mxu0 %v108
    %162 = vmatmul.f32.gmra.mxu0 %v123
    %v163 = vpop.f32.mrf.mxu0
    %v164 = vadd.f32 %v119, %v163
    %165 = vmatmul.f32.gmra.mxu0 %v126
    %v166 = vpop.f32.mrf.mxu0
    %v167 = vadd.f32 %v119, %v166
    %168 = vmatmul.f32.gmra.mxu0 %v129
    %v169 = vpop.f32.mrf.mxu0
    %v170 = vadd.f32 %v119, %v169
    %171 = vmatmul.f32.gmra.mxu0 %v132
    %v172 = vpop.f32.mrf.mxu0
    %v173 = vadd.f32 %v119, %v172
    %174 = vmatmul.f32.gmra.mxu0 %v135
    %v175 = vpop.f32.mrf.mxu0
    %v176 = vadd.f32 %v119, %v175
    %177 = vmatmul.f32.gmra.mxu0 %v138
    %v178 = vpop.f32.mrf.mxu0
    %v179 = vadd.f32 %v119, %v178
    %180 = vmatmul.f32.gmra.mxu0 %v141
    %v181 = vpop.f32.mrf.mxu0
    %v182 = vadd.f32 %v119, %v181
    %183 = vmatmul.f32.gmra.mxu0 %v144
    %v184 = vpop.f32.mrf.mxu0
    %v185 = vadd.f32 %v119, %v184
    %186 = vdwg.mxu0
    %v187 = vld [vmem:[%s2] sm:$0xff]
    %v188 = vld [vmem:[%s2 + $0x8] sm:$0xff]
    %v189 = vld [vmem:[%s2 + $0x10] sm:$0xff]
    %v190 = vld [vmem:[%s2 + $0x18] sm:$0xff]
    %v191 = vld [vmem:[%s4] sm:$0xff]
    %v192 = vld [vmem:[%s4 + $0x8] sm:$0xff]
    %v193 = vld [vmem:[%s4 + $0x10] sm:$0xff]
    %v194 = vld [vmem:[%s4 + $0x18] sm:$0xff]
    %v195 = vld [vmem:[%s6] sm:$0x1]
    %vm196 = vcmask 261120
    %v198 = vsel %vm196, 0.0, 0
    %200 = vmatpush.msra.mxu0 0.0
    %201 = vmatpush.msra.mxu0 0.0
    %202 = vmatpush.msra.mxu0 0.0
    %203 = vmatpush.msra.mxu0 0.0
    %204 = vmatpush.msra.mxu0 0.0
    %205 = vmatpush.msra.mxu0 0.0
    %206 = vmatpush.msra.mxu0 0.0
    %207 = vmatpush.msra.mxu0 0.0
    %208 = vmatpush.msra.mxu0 0.0
    %209 = vmatpush.msra.mxu0 0.0
    %210 = vmatpush.msra.mxu0 0.0
    %211 = vmatpush.msra.mxu0 0.0
    %212 = vmatpush.msra.mxu0 %v190
    %213 = vmatpush.msra.mxu0 %v189
    %214 = vmatpush.msra.mxu0 %v188
    %215 = vmatpush.msra.mxu0 %v187
    %216 = vmatmul.f32.gmra.mxu0 %v198
    %v217 = vpop.f32.mrf.mxu0
    %v218 = vadd.f32 %v164, %v217
    %219 = vdwg.mxu0
    %v220 = vxor.u32 %v218, 2147483648
    %v221 = vmul.f32 %v220, 1.442695
    %v222 = vpow.pop %v221
    %v223 = vadd.f32 %v222, 1.0
    %v224 = vrcp.pop %v223
    %v225 = vmul.f32 %v223, %v224
    %v226 = vsub.f32 1.0, %v225
    %v227 = vmul.f32 %v224, %v226
    %v228 = vadd.f32 %v224, %v227
    %vm229 = vweird.f32 %v223
    %vm230 = vweird.f32 %v224
    %vm231 = vmor %vm229, %vm230
    %v232 = vsel %vm231, %v224, %v228
    %v233 = vand.u32 2147483647, %v223
    %vm234 = vcmp.eq.f32.partialorder %v233, 8.507059e+37
    %v235 = vand.u32 %v223, 2147483648
    %v236 = vor.u32 1.1754944e-38, %v235
    %v237 = vsel %vm234, %v236, %v232
    %v238 = vmul.f32 1.0, %v237
    %v239 = vtanh.pop %v218
    %v240 = vmul.f32 %v238, 0.0
    %242 = vrot.lane.b32.xlu0 %v239, 32
    %v243 = vpop.permute.xlu0 %242
    %v245 = vmul.f32 %v238, %v243
    %247 = vrot.lane.b32.xlu0 %v245, 32
    %v248 = vpop.permute.xlu0 %247
    %v250 = vadd.f32 %v240, %v248
    %v251 = vtanh.pop %v250
    %253 = vrot.lane.b32.xlu0 %v251, 32
    %v254 = vpop.permute.xlu0 %253
    %v256 = vmul.f32 %v238, %v254
    %v258 = vperm.slane %v195, 0
    %261 = vrot.lane.b32.xlu0 %v256, 64
    %v262 = vpop.permute.xlu0 %261
    %v263 = vsel %vm196, %v262, 0
    %265 = vmatpush.msra.mxu0 0.0
    %266 = vmatpush.msra.mxu0 0.0
    %267 = vmatpush.msra.mxu0 0.0
    %268 = vmatpush.msra.mxu0 0.0
    %269 = vmatpush.msra.mxu0 0.0
    %270 = vmatpush.msra.mxu0 0.0
    %271 = vmatpush.msra.mxu0 0.0
    %272 = vmatpush.msra.mxu0 0.0
    %273 = vmatpush.msra.mxu0 0.0
    %274 = vmatpush.msra.mxu0 0.0
    %275 = vmatpush.msra.mxu0 0.0
    %276 = vmatpush.msra.mxu0 0.0
    %277 = vmatpush.msra.mxu0 %v194
    %278 = vmatpush.msra.mxu0 %v193
    %279 = vmatpush.msra.mxu0 %v192
    %280 = vmatpush.msra.mxu0 %v191
    %281 = vmatmul.f32.gmra.mxu0 %v263
    %v282 = vpop.f32.mrf.mxu0
    %v283 = vadd.f32 %v258, %v282
    %284 = vdwg.mxu0
    %285 = vmatpush.msra.mxu0 0.0
    %286 = vmatpush.msra.mxu0 0.0
    %287 = vmatpush.msra.mxu0 0.0
    %288 = vmatpush.msra.mxu0 0.0
    %289 = vmatpush.msra.mxu0 0.0
    %290 = vmatpush.msra.mxu0 0.0
    %291 = vmatpush.msra.mxu0 0.0
    %292 = vmatpush.msra.mxu0 0.0
    %293 = vmatpush.msra.mxu0 0.0
    %294 = vmatpush.msra.mxu0 0.0
    %295 = vmatpush.msra.mxu0 0.0
    %296 = vmatpush.msra.mxu0 0.0
    %297 = vmatpush.msra.mxu0 %v190
    %298 = vmatpush.msra.mxu0 %v189
    %299 = vmatpush.msra.mxu0 %v188
    %300 = vmatpush.msra.mxu0 %v187
    %301 = vmatmul.f32.gmra.mxu0 %v263
    %v302 = vpop.f32.mrf.mxu0
    %v303 = vadd.f32 %v167, %v302
    %304 = vdwg.mxu0
    %v305 = vxor.u32 %v303, 2147483648
    %v306 = vmul.f32 %v305, 1.442695
    %v307 = vpow.pop %v306
    %v308 = vadd.f32 %v307, 1.0
    %v309 = vrcp.pop %v308
    %v310 = vmul.f32 %v308, %v309
    %v311 = vsub.f32 1.0, %v310
    %v312 = vmul.f32 %v309, %v311
    %v313 = vadd.f32 %v309, %v312
    %vm314 = vweird.f32 %v308
    %vm315 = vweird.f32 %v309
    %vm316 = vmor %vm314, %vm315
    %v317 = vsel %vm316, %v309, %v313
    %v318 = vand.u32 2147483647, %v308
    %vm319 = vcmp.eq.f32.partialorder %v318, 8.507059e+37
    %v320 = vand.u32 %v308, 2147483648
    %v321 = vor.u32 1.1754944e-38, %v320
    %v322 = vsel %vm319, %v321, %v317
    %v323 = vmul.f32 1.0, %v322
    %v324 = vtanh.pop %v303
    %v325 = vmul.f32 %v323, %v250
    %327 = vrot.lane.b32.xlu0 %v324, 32
    %v328 = vpop.permute.xlu0 %327
    %v330 = vmul.f32 %v323, %v328
    %332 = vrot.lane.b32.xlu0 %v330, 32
    %v333 = vpop.permute.xlu0 %332
    %v335 = vadd.f32 %v325, %v333
    %v336 = vtanh.pop %v335
    %338 = vrot.lane.b32.xlu0 %v336, 32
    %v339 = vpop.permute.xlu0 %338
    %v341 = vmul.f32 %v323, %v339
    %343 = vrot.lane.b32.xlu0 %v341, 64
    %v344 = vpop.permute.xlu0 %343
    %v345 = vsel %vm196, %v344, 0
    %347 = vmatpush.msra.mxu0 0.0
    %348 = vmatpush.msra.mxu0 0.0
    %349 = vmatpush.msra.mxu0 0.0
    %350 = vmatpush.msra.mxu0 0.0
    %351 = vmatpush.msra.mxu0 0.0
    %352 = vmatpush.msra.mxu0 0.0
    %353 = vmatpush.msra.mxu0 0.0
    %354 = vmatpush.msra.mxu0 0.0
    %355 = vmatpush.msra.mxu0 0.0
    %356 = vmatpush.msra.mxu0 0.0
    %357 = vmatpush.msra.mxu0 0.0
    %358 = vmatpush.msra.mxu0 0.0
    %359 = vmatpush.msra.mxu0 %v194
    %360 = vmatpush.msra.mxu0 %v193
    %361 = vmatpush.msra.mxu0 %v192
    %362 = vmatpush.msra.mxu0 %v191
    %363 = vmatmul.f32.gmra.mxu0 %v345
    %v364 = vpop.f32.mrf.mxu0
    %v365 = vadd.f32 %v258, %v364
    %366 = vdwg.mxu0
    %367 = vmatpush.msra.mxu0 0.0
    %368 = vmatpush.msra.mxu0 0.0
    %369 = vmatpush.msra.mxu0 0.0
    %370 = vmatpush.msra.mxu0 0.0
    %371 = vmatpush.msra.mxu0 0.0
    %372 = vmatpush.msra.mxu0 0.0
    %373 = vmatpush.msra.mxu0 0.0
    %374 = vmatpush.msra.mxu0 0.0
    %375 = vmatpush.msra.mxu0 0.0
    %376 = vmatpush.msra.mxu0 0.0
    %377 = vmatpush.msra.mxu0 0.0
    %378 = vmatpush.msra.mxu0 0.0
    %379 = vmatpush.msra.mxu0 %v190
    %380 = vmatpush.msra.mxu0 %v189
    %381 = vmatpush.msra.mxu0 %v188
    %382 = vmatpush.msra.mxu0 %v187
    %383 = vmatmul.f32.gmra.mxu0 %v345
    %v384 = vpop.f32.mrf.mxu0
    %v385 = vadd.f32 %v170, %v384
    %386 = vdwg.mxu0
    %v387 = vxor.u32 %v385, 2147483648
    %v388 = vmul.f32 %v387, 1.442695
    %v389 = vpow.pop %v388
    %v390 = vadd.f32 %v389, 1.0
    %v391 = vrcp.pop %v390
    %v392 = vmul.f32 %v390, %v391
    %v393 = vsub.f32 1.0, %v392
    %v394 = vmul.f32 %v391, %v393
    %v395 = vadd.f32 %v391, %v394
    %vm396 = vweird.f32 %v390
    %vm397 = vweird.f32 %v391
    %vm398 = vmor %vm396, %vm397
    %v399 = vsel %vm398, %v391, %v395
    %v400 = vand.u32 2147483647, %v390
    %vm401 = vcmp.eq.f32.partialorder %v400, 8.507059e+37
    %v402 = vand.u32 %v390, 2147483648
    %v403 = vor.u32 1.1754944e-38, %v402
    %v404 = vsel %vm401, %v403, %v399
    %v405 = vmul.f32 1.0, %v404
    %v406 = vtanh.pop %v385
    %v407 = vmul.f32 %v405, %v335
    %409 = vrot.lane.b32.xlu0 %v406, 32
    %v410 = vpop.permute.xlu0 %409
    %v412 = vmul.f32 %v405, %v410
    %414 = vrot.lane.b32.xlu0 %v412, 32
    %v415 = vpop.permute.xlu0 %414
    %v417 = vadd.f32 %v407, %v415
    %v418 = vtanh.pop %v417
    %420 = vrot.lane.b32.xlu0 %v418, 32
    %v421 = vpop.permute.xlu0 %420
    %v423 = vmul.f32 %v405, %v421
    %425 = vrot.lane.b32.xlu0 %v423, 64
    %v426 = vpop.permute.xlu0 %425
    %v427 = vsel %vm196, %v426, 0
    %429 = vmatpush.msra.mxu0 0.0
    %430 = vmatpush.msra.mxu0 0.0
    %431 = vmatpush.msra.mxu0 0.0
    %432 = vmatpush.msra.mxu0 0.0
    %433 = vmatpush.msra.mxu0 0.0
    %434 = vmatpush.msra.mxu0 0.0
    %435 = vmatpush.msra.mxu0 0.0
    %436 = vmatpush.msra.mxu0 0.0
    %437 = vmatpush.msra.mxu0 0.0
    %438 = vmatpush.msra.mxu0 0.0
    %439 = vmatpush.msra.mxu0 0.0
    %440 = vmatpush.msra.mxu0 0.0
    %441 = vmatpush.msra.mxu0 %v194
    %442 = vmatpush.msra.mxu0 %v193
    %443 = vmatpush.msra.mxu0 %v192
    %444 = vmatpush.msra.mxu0 %v191
    %445 = vmatmul.f32.gmra.mxu0 %v427
    %v446 = vpop.f32.mrf.mxu0
    %v447 = vadd.f32 %v258, %v446
    %448 = vdwg.mxu0
    %449 = vmatpush.msra.mxu0 0.0
    %450 = vmatpush.msra.mxu0 0.0
    %451 = vmatpush.msra.mxu0 0.0
    %452 = vmatpush.msra.mxu0 0.0
    %453 = vmatpush.msra.mxu0 0.0
    %454 = vmatpush.msra.mxu0 0.0
    %455 = vmatpush.msra.mxu0 0.0
    %456 = vmatpush.msra.mxu0 0.0
    %457 = vmatpush.msra.mxu0 0.0
    %458 = vmatpush.msra.mxu0 0.0
    %459 = vmatpush.msra.mxu0 0.0
    %460 = vmatpush.msra.mxu0 0.0
    %461 = vmatpush.msra.mxu0 %v190
    %462 = vmatpush.msra.mxu0 %v189
    %463 = vmatpush.msra.mxu0 %v188
    %464 = vmatpush.msra.mxu0 %v187
    %465 = vmatmul.f32.gmra.mxu0 %v427
    %v466 = vpop.f32.mrf.mxu0
    %v467 = vadd.f32 %v173, %v466
    %468 = vdwg.mxu0
    %v469 = vxor.u32 %v467, 2147483648
    %v470 = vmul.f32 %v469, 1.442695
    %v471 = vpow.pop %v470
    %v472 = vadd.f32 %v471, 1.0
    %v473 = vrcp.pop %v472
    %v474 = vmul.f32 %v472, %v473
    %v475 = vsub.f32 1.0, %v474
    %v476 = vmul.f32 %v473, %v475
    %v477 = vadd.f32 %v473, %v476
    %vm478 = vweird.f32 %v472
    %vm479 = vweird.f32 %v473
    %vm480 = vmor %vm478, %vm479
    %v481 = vsel %vm480, %v473, %v477
    %v482 = vand.u32 2147483647, %v472
    %vm483 = vcmp.eq.f32.partialorder %v482, 8.507059e+37
    %v484 = vand.u32 %v472, 2147483648
    %v485 = vor.u32 1.1754944e-38, %v484
    %v486 = vsel %vm483, %v485, %v481
    %v487 = vmul.f32 1.0, %v486
    %v488 = vtanh.pop %v467
    %v489 = vmul.f32 %v487, %v417
    %491 = vrot.lane.b32.xlu0 %v488, 32
    %v492 = vpop.permute.xlu0 %491
    %v494 = vmul.f32 %v487, %v492
    %496 = vrot.lane.b32.xlu0 %v494, 32
    %v497 = vpop.permute.xlu0 %496
    %v499 = vadd.f32 %v489, %v497
    %v500 = vtanh.pop %v499
    %502 = vrot.lane.b32.xlu0 %v500, 32
    %v503 = vpop.permute.xlu0 %502
    %v505 = vmul.f32 %v487, %v503
    %507 = vrot.lane.b32.xlu0 %v505, 64
    %v508 = vpop.permute.xlu0 %507
    %v509 = vsel %vm196, %v508, 0
    %511 = vmatpush.msra.mxu0 0.0
    %512 = vmatpush.msra.mxu0 0.0
    %513 = vmatpush.msra.mxu0 0.0
    %514 = vmatpush.msra.mxu0 0.0
    %515 = vmatpush.msra.mxu0 0.0
    %516 = vmatpush.msra.mxu0 0.0
    %517 = vmatpush.msra.mxu0 0.0
    %518 = vmatpush.msra.mxu0 0.0
    %519 = vmatpush.msra.mxu0 0.0
    %520 = vmatpush.msra.mxu0 0.0
    %521 = vmatpush.msra.mxu0 0.0
    %522 = vmatpush.msra.mxu0 0.0
    %523 = vmatpush.msra.mxu0 %v194
    %524 = vmatpush.msra.mxu0 %v193
    %525 = vmatpush.msra.mxu0 %v192
    %526 = vmatpush.msra.mxu0 %v191
    %527 = vmatmul.f32.gmra.mxu0 %v509
    %v528 = vpop.f32.mrf.mxu0
    %v529 = vadd.f32 %v258, %v528
    %530 = vdwg.mxu0
    %531 = vmatpush.msra.mxu0 0.0
    %532 = vmatpush.msra.mxu0 0.0
    %533 = vmatpush.msra.mxu0 0.0
    %534 = vmatpush.msra.mxu0 0.0
    %535 = vmatpush.msra.mxu0 0.0
    %536 = vmatpush.msra.mxu0 0.0
    %537 = vmatpush.msra.mxu0 0.0
    %538 = vmatpush.msra.mxu0 0.0
    %539 = vmatpush.msra.mxu0 0.0
    %540 = vmatpush.msra.mxu0 0.0
    %541 = vmatpush.msra.mxu0 0.0
    %542 = vmatpush.msra.mxu0 0.0
    %543 = vmatpush.msra.mxu0 %v190
    %544 = vmatpush.msra.mxu0 %v189
    %545 = vmatpush.msra.mxu0 %v188
    %546 = vmatpush.msra.mxu0 %v187
    %547 = vmatmul.f32.gmra.mxu0 %v509
    %v548 = vpop.f32.mrf.mxu0
    %v549 = vadd.f32 %v176, %v548
    %550 = vdwg.mxu0
    %v551 = vxor.u32 %v549, 2147483648
    %v552 = vmul.f32 %v551, 1.442695
    %v553 = vpow.pop %v552
    %v554 = vadd.f32 %v553, 1.0
    %v555 = vrcp.pop %v554
    %v556 = vmul.f32 %v554, %v555
    %v557 = vsub.f32 1.0, %v556
    %v558 = vmul.f32 %v555, %v557
    %v559 = vadd.f32 %v555, %v558
    %vm560 = vweird.f32 %v554
    %vm561 = vweird.f32 %v555
    %vm562 = vmor %vm560, %vm561
    %v563 = vsel %vm562, %v555, %v559
    %v564 = vand.u32 2147483647, %v554
    %vm565 = vcmp.eq.f32.partialorder %v564, 8.507059e+37
    %v566 = vand.u32 %v554, 2147483648
    %v567 = vor.u32 1.1754944e-38, %v566
    %v568 = vsel %vm565, %v567, %v563
    %v569 = vmul.f32 1.0, %v568
    %v570 = vtanh.pop %v549
    %v571 = vmul.f32 %v569, %v499
    %573 = vrot.lane.b32.xlu0 %v570, 32
    %v574 = vpop.permute.xlu0 %573
    %v576 = vmul.f32 %v569, %v574
    %578 = vrot.lane.b32.xlu0 %v576, 32
    %v579 = vpop.permute.xlu0 %578
    %v581 = vadd.f32 %v571, %v579
    %v582 = vtanh.pop %v581
    %584 = vrot.lane.b32.xlu0 %v582, 32
    %v585 = vpop.permute.xlu0 %584
    %v587 = vmul.f32 %v569, %v585
    %589 = vrot.lane.b32.xlu0 %v587, 64
    %v590 = vpop.permute.xlu0 %589
    %v591 = vsel %vm196, %v590, 0
    %593 = vmatpush.msra.mxu0 0.0
    %594 = vmatpush.msra.mxu0 0.0
    %595 = vmatpush.msra.mxu0 0.0
    %596 = vmatpush.msra.mxu0 0.0
    %597 = vmatpush.msra.mxu0 0.0
    %598 = vmatpush.msra.mxu0 0.0
    %599 = vmatpush.msra.mxu0 0.0
    %600 = vmatpush.msra.mxu0 0.0
    %601 = vmatpush.msra.mxu0 0.0
    %602 = vmatpush.msra.mxu0 0.0
    %603 = vmatpush.msra.mxu0 0.0
    %604 = vmatpush.msra.mxu0 0.0
    %605 = vmatpush.msra.mxu0 %v194
    %606 = vmatpush.msra.mxu0 %v193
    %607 = vmatpush.msra.mxu0 %v192
    %608 = vmatpush.msra.mxu0 %v191
    %609 = vmatmul.f32.gmra.mxu0 %v591
    %v610 = vpop.f32.mrf.mxu0
    %v611 = vadd.f32 %v258, %v610
    %612 = vdwg.mxu0
    %613 = vmatpush.msra.mxu0 0.0
    %614 = vmatpush.msra.mxu0 0.0
    %615 = vmatpush.msra.mxu0 0.0
    %616 = vmatpush.msra.mxu0 0.0
    %617 = vmatpush.msra.mxu0 0.0
    %618 = vmatpush.msra.mxu0 0.0
    %619 = vmatpush.msra.mxu0 0.0
    %620 = vmatpush.msra.mxu0 0.0
    %621 = vmatpush.msra.mxu0 0.0
    %622 = vmatpush.msra.mxu0 0.0
    %623 = vmatpush.msra.mxu0 0.0
    %624 = vmatpush.msra.mxu0 0.0
    %625 = vmatpush.msra.mxu0 %v190
    %626 = vmatpush.msra.mxu0 %v189
    %627 = vmatpush.msra.mxu0 %v188
    %628 = vmatpush.msra.mxu0 %v187
    %629 = vmatmul.f32.gmra.mxu0 %v591
    %v630 = vpop.f32.mrf.mxu0
    %v631 = vadd.f32 %v179, %v630
    %632 = vdwg.mxu0
    %v633 = vxor.u32 %v631, 2147483648
    %v634 = vmul.f32 %v633, 1.442695
    %v635 = vpow.pop %v634
    %v636 = vadd.f32 %v635, 1.0
    %v637 = vrcp.pop %v636
    %v638 = vmul.f32 %v636, %v637
    %v639 = vsub.f32 1.0, %v638
    %v640 = vmul.f32 %v637, %v639
    %v641 = vadd.f32 %v637, %v640
    %vm642 = vweird.f32 %v636
    %vm643 = vweird.f32 %v637
    %vm644 = vmor %vm642, %vm643
    %v645 = vsel %vm644, %v637, %v641
    %v646 = vand.u32 2147483647, %v636
    %vm647 = vcmp.eq.f32.partialorder %v646, 8.507059e+37
    %v648 = vand.u32 %v636, 2147483648
    %v649 = vor.u32 1.1754944e-38, %v648
    %v650 = vsel %vm647, %v649, %v645
    %v651 = vmul.f32 1.0, %v650
    %v652 = vtanh.pop %v631
    %v653 = vmul.f32 %v651, %v581
    %655 = vrot.lane.b32.xlu0 %v652, 32
    %v656 = vpop.permute.xlu0 %655
    %v658 = vmul.f32 %v651, %v656
    %660 = vrot.lane.b32.xlu0 %v658, 32
    %v661 = vpop.permute.xlu0 %660
    %v663 = vadd.f32 %v653, %v661
    %v664 = vtanh.pop %v663
    %666 = vrot.lane.b32.xlu0 %v664, 32
    %v667 = vpop.permute.xlu0 %666
    %v669 = vmul.f32 %v651, %v667
    %671 = vrot.lane.b32.xlu0 %v669, 64
    %v672 = vpop.permute.xlu0 %671
    %v673 = vsel %vm196, %v672, 0
    %675 = vmatpush.msra.mxu0 0.0
    %676 = vmatpush.msra.mxu0 0.0
    %677 = vmatpush.msra.mxu0 0.0
    %678 = vmatpush.msra.mxu0 0.0
    %679 = vmatpush.msra.mxu0 0.0
    %680 = vmatpush.msra.mxu0 0.0
    %681 = vmatpush.msra.mxu0 0.0
    %682 = vmatpush.msra.mxu0 0.0
    %683 = vmatpush.msra.mxu0 0.0
    %684 = vmatpush.msra.mxu0 0.0
    %685 = vmatpush.msra.mxu0 0.0
    %686 = vmatpush.msra.mxu0 0.0
    %687 = vmatpush.msra.mxu0 %v194
    %688 = vmatpush.msra.mxu0 %v193
    %689 = vmatpush.msra.mxu0 %v192
    %690 = vmatpush.msra.mxu0 %v191
    %691 = vmatmul.f32.gmra.mxu0 %v673
    %v692 = vpop.f32.mrf.mxu0
    %v693 = vadd.f32 %v258, %v692
    %694 = vdwg.mxu0
    %695 = vmatpush.msra.mxu0 0.0
    %696 = vmatpush.msra.mxu0 0.0
    %697 = vmatpush.msra.mxu0 0.0
    %698 = vmatpush.msra.mxu0 0.0
    %699 = vmatpush.msra.mxu0 0.0
    %700 = vmatpush.msra.mxu0 0.0
    %701 = vmatpush.msra.mxu0 0.0
    %702 = vmatpush.msra.mxu0 0.0
    %703 = vmatpush.msra.mxu0 0.0
    %704 = vmatpush.msra.mxu0 0.0
    %705 = vmatpush.msra.mxu0 0.0
    %706 = vmatpush.msra.mxu0 0.0
    %707 = vmatpush.msra.mxu0 %v190
    %708 = vmatpush.msra.mxu0 %v189
    %709 = vmatpush.msra.mxu0 %v188
    %710 = vmatpush.msra.mxu0 %v187
    %711 = vmatmul.f32.gmra.mxu0 %v673
    %v712 = vpop.f32.mrf.mxu0
    %v713 = vadd.f32 %v182, %v712
    %714 = vdwg.mxu0
    %v715 = vxor.u32 %v713, 2147483648
    %v716 = vmul.f32 %v715, 1.442695
    %v717 = vpow.pop %v716
    %v718 = vadd.f32 %v717, 1.0
    %v719 = vrcp.pop %v718
    %v720 = vmul.f32 %v718, %v719
    %v721 = vsub.f32 1.0, %v720
    %v722 = vmul.f32 %v719, %v721
    %v723 = vadd.f32 %v719, %v722
    %vm724 = vweird.f32 %v718
    %vm725 = vweird.f32 %v719
    %vm726 = vmor %vm724, %vm725
    %v727 = vsel %vm726, %v719, %v723
    %v728 = vand.u32 2147483647, %v718
    %vm729 = vcmp.eq.f32.partialorder %v728, 8.507059e+37
    %v730 = vand.u32 %v718, 2147483648
    %v731 = vor.u32 1.1754944e-38, %v730
    %v732 = vsel %vm729, %v731, %v727
    %v733 = vmul.f32 1.0, %v732
    %v734 = vtanh.pop %v713
    %v735 = vmul.f32 %v733, %v663
    %737 = vrot.lane.b32.xlu0 %v734, 32
    %v738 = vpop.permute.xlu0 %737
    %v740 = vmul.f32 %v733, %v738
    %742 = vrot.lane.b32.xlu0 %v740, 32
    %v743 = vpop.permute.xlu0 %742
    %v745 = vadd.f32 %v735, %v743
    %v746 = vtanh.pop %v745
    %748 = vrot.lane.b32.xlu0 %v746, 32
    %v749 = vpop.permute.xlu0 %748
    %v751 = vmul.f32 %v733, %v749
    %753 = vrot.lane.b32.xlu0 %v751, 64
    %v754 = vpop.permute.xlu0 %753
    %v755 = vsel %vm196, %v754, 0
    %757 = vmatpush.msra.mxu0 0.0
    %758 = vmatpush.msra.mxu0 0.0
    %759 = vmatpush.msra.mxu0 0.0
    %760 = vmatpush.msra.mxu0 0.0
    %761 = vmatpush.msra.mxu0 0.0
    %762 = vmatpush.msra.mxu0 0.0
    %763 = vmatpush.msra.mxu0 0.0
    %764 = vmatpush.msra.mxu0 0.0
    %765 = vmatpush.msra.mxu0 0.0
    %766 = vmatpush.msra.mxu0 0.0
    %767 = vmatpush.msra.mxu0 0.0
    %768 = vmatpush.msra.mxu0 0.0
    %769 = vmatpush.msra.mxu0 %v194
    %770 = vmatpush.msra.mxu0 %v193
    %771 = vmatpush.msra.mxu0 %v192
    %772 = vmatpush.msra.mxu0 %v191
    %773 = vmatmul.f32.gmra.mxu0 %v755
    %v774 = vpop.f32.mrf.mxu0
    %v775 = vadd.f32 %v258, %v774
    %776 = vdwg.mxu0
    %777 = vmatpush.msra.mxu0 0.0
    %778 = vmatpush.msra.mxu0 0.0
    %779 = vmatpush.msra.mxu0 0.0
    %780 = vmatpush.msra.mxu0 0.0
    %781 = vmatpush.msra.mxu0 0.0
    %782 = vmatpush.msra.mxu0 0.0
    %783 = vmatpush.msra.mxu0 0.0
    %784 = vmatpush.msra.mxu0 0.0
    %785 = vmatpush.msra.mxu0 0.0
    %786 = vmatpush.msra.mxu0 0.0
    %787 = vmatpush.msra.mxu0 0.0
    %788 = vmatpush.msra.mxu0 0.0
    %789 = vmatpush.msra.mxu0 %v190
    %790 = vmatpush.msra.mxu0 %v189
    %791 = vmatpush.msra.mxu0 %v188
    %792 = vmatpush.msra.mxu0 %v187
    %793 = vmatmul.f32.gmra.mxu0 %v755
    %v794 = vpop.f32.mrf.mxu0
    %v795 = vadd.f32 %v185, %v794
    %796 = vdwg.mxu0
    %v797 = vxor.u32 %v795, 2147483648
    %v798 = vmul.f32 %v797, 1.442695
    %v799 = vpow.pop %v798
    %v800 = vadd.f32 %v799, 1.0
    %v801 = vrcp.pop %v800
    %v802 = vmul.f32 %v800, %v801
    %v803 = vsub.f32 1.0, %v802
    %v804 = vmul.f32 %v801, %v803
    %v805 = vadd.f32 %v801, %v804
    %vm806 = vweird.f32 %v800
    %vm807 = vweird.f32 %v801
    %vm808 = vmor %vm806, %vm807
    %v809 = vsel %vm808, %v801, %v805
    %v810 = vand.u32 2147483647, %v800
    %vm811 = vcmp.eq.f32.partialorder %v810, 8.507059e+37
    %v812 = vand.u32 %v800, 2147483648
    %v813 = vor.u32 1.1754944e-38, %v812
    %v814 = vsel %vm811, %v813, %v809
    %v815 = vmul.f32 1.0, %v814
    %v816 = vtanh.pop %v795
    %v817 = vmul.f32 %v815, %v745
    %819 = vrot.lane.b32.xlu0 %v816, 32
    %v820 = vpop.permute.xlu0 %819
    %v822 = vmul.f32 %v815, %v820
    %824 = vrot.lane.b32.xlu0 %v822, 32
    %v825 = vpop.permute.xlu0 %824
    %v827 = vadd.f32 %v817, %v825
    %v828 = vtanh.pop %v827
    %830 = vrot.lane.b32.xlu0 %v828, 32
    %v831 = vpop.permute.xlu0 %830
    %v833 = vmul.f32 %v815, %v831
    %835 = vrot.lane.b32.xlu0 %v833, 64
    %v836 = vpop.permute.xlu0 %835
    %v837 = vsel %vm196, %v836, 0
    %839 = vmatpush.msra.mxu0 0.0
    %840 = vmatpush.msra.mxu0 0.0
    %841 = vmatpush.msra.mxu0 0.0
    %842 = vmatpush.msra.mxu0 0.0
    %843 = vmatpush.msra.mxu0 0.0
    %844 = vmatpush.msra.mxu0 0.0
    %845 = vmatpush.msra.mxu0 0.0
    %846 = vmatpush.msra.mxu0 0.0
    %847 = vmatpush.msra.mxu0 0.0
    %848 = vmatpush.msra.mxu0 0.0
    %849 = vmatpush.msra.mxu0 0.0
    %850 = vmatpush.msra.mxu0 0.0
    %851 = vmatpush.msra.mxu0 %v194
    %852 = vmatpush.msra.mxu0 %v193
    %853 = vmatpush.msra.mxu0 %v192
    %854 = vmatpush.msra.mxu0 %v191
    %855 = vmatmul.f32.gmra.mxu0 %v837
    %v856 = vpop.f32.mrf.mxu0
    %v857 = vadd.f32 %v258, %v856
    %858 = vdwg.mxu0
    %v859 = vld [vmem:[#allocation2] sm:$0xff]
    %v860 = vld [vmem:[#allocation2 + $0x8] sm:$0xff]
    %v861 = vld [vmem:[#allocation2 + $0x10] sm:$0xff]
    %v862 = vld [vmem:[#allocation2 + $0x18] sm:$0xff]
    %863 = vmatpush.msra.mxu0 0.0
    %864 = vmatpush.msra.mxu0 0.0
    %865 = vmatpush.msra.mxu0 0.0
    %866 = vmatpush.msra.mxu0 0.0
    %867 = vmatpush.msra.mxu0 0.0
    %868 = vmatpush.msra.mxu0 0.0
    %869 = vmatpush.msra.mxu0 0.0
    %870 = vmatpush.msra.mxu0 0.0
    %871 = vmatpush.msra.mxu0 0.0
    %872 = vmatpush.msra.mxu0 0.0
    %873 = vmatpush.msra.mxu0 0.0
    %874 = vmatpush.msra.mxu0 0.0
    %875 = vmatpush.msra.mxu0 %v862
    %876 = vmatpush.msra.mxu0 %v861
    %877 = vmatpush.msra.mxu0 %v860
    %878 = vmatpush.msra.mxu0 %v859
    %879 = vmatmul.f32.gmra.mxu0 %v837
    %v880 = vpop.f32.mrf.mxu0
    %v881 = vadd.f32 %v283, %v880
    %882 = vdwg.mxu0
    %v883 = vxor.u32 %v881, 2147483648
    %v884 = vmul.f32 %v883, 1.442695
    %v885 = vpow.pop %v884
    %v886 = vadd.f32 %v885, 1.0
    %v887 = vrcp.pop %v886
    %v888 = vmul.f32 %v886, %v887
    %v889 = vsub.f32 1.0, %v888
    %v890 = vmul.f32 %v887, %v889
    %v891 = vadd.f32 %v887, %v890
    %vm892 = vweird.f32 %v886
    %vm893 = vweird.f32 %v887
    %vm894 = vmor %vm892, %vm893
    %v895 = vsel %vm894, %v887, %v891
    %v896 = vand.u32 2147483647, %v886
    %vm897 = vcmp.eq.f32.partialorder %v896, 8.507059e+37
    %v898 = vand.u32 %v886, 2147483648
    %v899 = vor.u32 1.1754944e-38, %v898
    %v900 = vsel %vm897, %v899, %v895
    %v901 = vmul.f32 1.0, %v900
    %v902 = vtanh.pop %v881
    %v903 = vmul.f32 %v901, %v827
    %905 = vrot.lane.b32.xlu0 %v902, 32
    %v906 = vpop.permute.xlu0 %905
    %v908 = vmul.f32 %v901, %v906
    %910 = vrot.lane.b32.xlu0 %v908, 32
    %v911 = vpop.permute.xlu0 %910
    %v913 = vadd.f32 %v903, %v911
    %v914 = vtanh.pop %v913
    %916 = vrot.lane.b32.xlu0 %v914, 32
    %v917 = vpop.permute.xlu0 %916
    %v919 = vmul.f32 %v901, %v917
    %921 = vrot.lane.b32.xlu0 %v919, 64
    %v922 = vpop.permute.xlu0 %921
    %v923 = vsel %vm196, %v922, 0
    %925 = vmatpush.msra.mxu0 0.0
    %926 = vmatpush.msra.mxu0 0.0
    %927 = vmatpush.msra.mxu0 0.0
    %928 = vmatpush.msra.mxu0 0.0
    %929 = vmatpush.msra.mxu0 0.0
    %930 = vmatpush.msra.mxu0 0.0
    %931 = vmatpush.msra.mxu0 0.0
    %932 = vmatpush.msra.mxu0 0.0
    %933 = vmatpush.msra.mxu0 0.0
    %934 = vmatpush.msra.mxu0 0.0
    %935 = vmatpush.msra.mxu0 0.0
    %936 = vmatpush.msra.mxu0 0.0
    %937 = vmatpush.msra.mxu0 %v862
    %938 = vmatpush.msra.mxu0 %v861
    %939 = vmatpush.msra.mxu0 %v860
    %940 = vmatpush.msra.mxu0 %v859
    %941 = vmatmul.f32.gmra.mxu0 %v923
    %v942 = vpop.f32.mrf.mxu0
    %v943 = vadd.f32 %v365, %v942
    %944 = vdwg.mxu0
    %v945 = vxor.u32 %v943, 2147483648
    %v946 = vmul.f32 %v945, 1.442695
    %v947 = vpow.pop %v946
    %v948 = vadd.f32 %v947, 1.0
    %v949 = vrcp.pop %v948
    %v950 = vmul.f32 %v948, %v949
    %v951 = vsub.f32 1.0, %v950
    %v952 = vmul.f32 %v949, %v951
    %v953 = vadd.f32 %v949, %v952
    %vm954 = vweird.f32 %v948
    %vm955 = vweird.f32 %v949
    %vm956 = vmor %vm954, %vm955
    %v957 = vsel %vm956, %v949, %v953
    %v958 = vand.u32 2147483647, %v948
    %vm959 = vcmp.eq.f32.partialorder %v958, 8.507059e+37
    %v960 = vand.u32 %v948, 2147483648
    %v961 = vor.u32 1.1754944e-38, %v960
    %v962 = vsel %vm959, %v961, %v957
    %v963 = vmul.f32 1.0, %v962
    %v964 = vtanh.pop %v943
    %v965 = vmul.f32 %v963, %v913
    %967 = vrot.lane.b32.xlu0 %v964, 32
    %v968 = vpop.permute.xlu0 %967
    %v970 = vmul.f32 %v963, %v968
    %972 = vrot.lane.b32.xlu0 %v970, 32
    %v973 = vpop.permute.xlu0 %972
    %v975 = vadd.f32 %v965, %v973
    %v976 = vtanh.pop %v975
    %978 = vrot.lane.b32.xlu0 %v976, 32
    %v979 = vpop.permute.xlu0 %978
    %v981 = vmul.f32 %v963, %v979
    %983 = vrot.lane.b32.xlu0 %v981, 64
    %v984 = vpop.permute.xlu0 %983
    %v985 = vsel %vm196, %v984, 0
    %987 = vmatpush.msra.mxu0 0.0
    %988 = vmatpush.msra.mxu0 0.0
    %989 = vmatpush.msra.mxu0 0.0
    %990 = vmatpush.msra.mxu0 0.0
    %991 = vmatpush.msra.mxu0 0.0
    %992 = vmatpush.msra.mxu0 0.0
    %993 = vmatpush.msra.mxu0 0.0
    %994 = vmatpush.msra.mxu0 0.0
    %995 = vmatpush.msra.mxu0 0.0
    %996 = vmatpush.msra.mxu0 0.0
    %997 = vmatpush.msra.mxu0 0.0
    %998 = vmatpush.msra.mxu0 0.0
    %999 = vmatpush.msra.mxu0 %v862
    %1000 = vmatpush.msra.mxu0 %v861
    %1001 = vmatpush.msra.mxu0 %v860
    %1002 = vmatpush.msra.mxu0 %v859
    %1003 = vmatmul.f32.gmra.mxu0 %v985
    %v1004 = vpop.f32.mrf.mxu0
    %v1005 = vadd.f32 %v447, %v1004
    %1006 = vdwg.mxu0
    %v1007 = vxor.u32 %v1005, 2147483648
    %v1008 = vmul.f32 %v1007, 1.442695
    %v1009 = vpow.pop %v1008
    %v1010 = vadd.f32 %v1009, 1.0
    %v1011 = vrcp.pop %v1010
    %v1012 = vmul.f32 %v1010, %v1011
    %v1013 = vsub.f32 1.0, %v1012
    %v1014 = vmul.f32 %v1011, %v1013
    %v1015 = vadd.f32 %v1011, %v1014
    %vm1016 = vweird.f32 %v1010
    %vm1017 = vweird.f32 %v1011
    %vm1018 = vmor %vm1016, %vm1017
    %v1019 = vsel %vm1018, %v1011, %v1015
    %v1020 = vand.u32 2147483647, %v1010
    %vm1021 = vcmp.eq.f32.partialorder %v1020, 8.507059e+37
    %v1022 = vand.u32 %v1010, 2147483648
    %v1023 = vor.u32 1.1754944e-38, %v1022
    %v1024 = vsel %vm1021, %v1023, %v1019
    %v1025 = vmul.f32 1.0, %v1024
    %v1026 = vtanh.pop %v1005
    %v1027 = vmul.f32 %v1025, %v975
    %1029 = vrot.lane.b32.xlu0 %v1026, 32
    %v1030 = vpop.permute.xlu0 %1029
    %v1032 = vmul.f32 %v1025, %v1030
    %1034 = vrot.lane.b32.xlu0 %v1032, 32
    %v1035 = vpop.permute.xlu0 %1034
    %v1037 = vadd.f32 %v1027, %v1035
    %v1038 = vtanh.pop %v1037
    %1040 = vrot.lane.b32.xlu0 %v1038, 32
    %v1041 = vpop.permute.xlu0 %1040
    %v1043 = vmul.f32 %v1025, %v1041
    %1045 = vrot.lane.b32.xlu0 %v1043, 64
    %v1046 = vpop.permute.xlu0 %1045
    %v1047 = vsel %vm196, %v1046, 0
    %1049 = vmatpush.msra.mxu0 0.0
    %1050 = vmatpush.msra.mxu0 0.0
    %1051 = vmatpush.msra.mxu0 0.0
    %1052 = vmatpush.msra.mxu0 0.0
    %1053 = vmatpush.msra.mxu0 0.0
    %1054 = vmatpush.msra.mxu0 0.0
    %1055 = vmatpush.msra.mxu0 0.0
    %1056 = vmatpush.msra.mxu0 0.0
    %1057 = vmatpush.msra.mxu0 0.0
    %1058 = vmatpush.msra.mxu0 0.0
    %1059 = vmatpush.msra.mxu0 0.0
    %1060 = vmatpush.msra.mxu0 0.0
    %1061 = vmatpush.msra.mxu0 %v862
    %1062 = vmatpush.msra.mxu0 %v861
    %1063 = vmatpush.msra.mxu0 %v860
    %1064 = vmatpush.msra.mxu0 %v859
    %1065 = vmatmul.f32.gmra.mxu0 %v1047
    %v1066 = vpop.f32.mrf.mxu0
    %v1067 = vadd.f32 %v529, %v1066
    %1068 = vdwg.mxu0
    %v1069 = vxor.u32 %v1067, 2147483648
    %v1070 = vmul.f32 %v1069, 1.442695
    %v1071 = vpow.pop %v1070
    %v1072 = vadd.f32 %v1071, 1.0
    %v1073 = vrcp.pop %v1072
    %v1074 = vmul.f32 %v1072, %v1073
    %v1075 = vsub.f32 1.0, %v1074
    %v1076 = vmul.f32 %v1073, %v1075
    %v1077 = vadd.f32 %v1073, %v1076
    %vm1078 = vweird.f32 %v1072
    %vm1079 = vweird.f32 %v1073
    %vm1080 = vmor %vm1078, %vm1079
    %v1081 = vsel %vm1080, %v1073, %v1077
    %v1082 = vand.u32 2147483647, %v1072
    %vm1083 = vcmp.eq.f32.partialorder %v1082, 8.507059e+37
    %v1084 = vand.u32 %v1072, 2147483648
    %v1085 = vor.u32 1.1754944e-38, %v1084
    %v1086 = vsel %vm1083, %v1085, %v1081
    %v1087 = vmul.f32 1.0, %v1086
    %v1088 = vtanh.pop %v1067
    %v1089 = vmul.f32 %v1087, %v1037
    %1091 = vrot.lane.b32.xlu0 %v1088, 32
    %v1092 = vpop.permute.xlu0 %1091
    %v1094 = vmul.f32 %v1087, %v1092
    %1096 = vrot.lane.b32.xlu0 %v1094, 32
    %v1097 = vpop.permute.xlu0 %1096
    %v1099 = vadd.f32 %v1089, %v1097
    %v1100 = vtanh.pop %v1099
    %1102 = vrot.lane.b32.xlu0 %v1100, 32
    %v1103 = vpop.permute.xlu0 %1102
    %v1105 = vmul.f32 %v1087, %v1103
    %1107 = vrot.lane.b32.xlu0 %v1105, 64
    %v1108 = vpop.permute.xlu0 %1107
    %v1109 = vsel %vm196, %v1108, 0
    %1111 = vmatpush.msra.mxu0 0.0
    %1112 = vmatpush.msra.mxu0 0.0
    %1113 = vmatpush.msra.mxu0 0.0
    %1114 = vmatpush.msra.mxu0 0.0
    %1115 = vmatpush.msra.mxu0 0.0
    %1116 = vmatpush.msra.mxu0 0.0
    %1117 = vmatpush.msra.mxu0 0.0
    %1118 = vmatpush.msra.mxu0 0.0
    %1119 = vmatpush.msra.mxu0 0.0
    %1120 = vmatpush.msra.mxu0 0.0
    %1121 = vmatpush.msra.mxu0 0.0
    %1122 = vmatpush.msra.mxu0 0.0
    %1123 = vmatpush.msra.mxu0 %v862
    %1124 = vmatpush.msra.mxu0 %v861
    %1125 = vmatpush.msra.mxu0 %v860
    %1126 = vmatpush.msra.mxu0 %v859
    %1127 = vmatmul.f32.gmra.mxu0 %v1109
    %v1128 = vpop.f32.mrf.mxu0
    %v1129 = vadd.f32 %v611, %v1128
    %1130 = vdwg.mxu0
    %v1131 = vxor.u32 %v1129, 2147483648
    %v1132 = vmul.f32 %v1131, 1.442695
    %v1133 = vpow.pop %v1132
    %v1134 = vadd.f32 %v1133, 1.0
    %v1135 = vrcp.pop %v1134
    %v1136 = vmul.f32 %v1134, %v1135
    %v1137 = vsub.f32 1.0, %v1136
    %v1138 = vmul.f32 %v1135, %v1137
    %v1139 = vadd.f32 %v1135, %v1138
    %vm1140 = vweird.f32 %v1134
    %vm1141 = vweird.f32 %v1135
    %vm1142 = vmor %vm1140, %vm1141
    %v1143 = vsel %vm1142, %v1135, %v1139
    %v1144 = vand.u32 2147483647, %v1134
    %vm1145 = vcmp.eq.f32.partialorder %v1144, 8.507059e+37
    %v1146 = vand.u32 %v1134, 2147483648
    %v1147 = vor.u32 1.1754944e-38, %v1146
    %v1148 = vsel %vm1145, %v1147, %v1143
    %v1149 = vmul.f32 1.0, %v1148
    %v1150 = vtanh.pop %v1129
    %v1151 = vmul.f32 %v1149, %v1099
    %1153 = vrot.lane.b32.xlu0 %v1150, 32
    %v1154 = vpop.permute.xlu0 %1153
    %v1156 = vmul.f32 %v1149, %v1154
    %1158 = vrot.lane.b32.xlu0 %v1156, 32
    %v1159 = vpop.permute.xlu0 %1158
    %v1161 = vadd.f32 %v1151, %v1159
    %v1162 = vtanh.pop %v1161
    %1164 = vrot.lane.b32.xlu0 %v1162, 32
    %v1165 = vpop.permute.xlu0 %1164
    %v1167 = vmul.f32 %v1149, %v1165
    %1169 = vrot.lane.b32.xlu0 %v1167, 64
    %v1170 = vpop.permute.xlu0 %1169
    %v1171 = vsel %vm196, %v1170, 0
    %1173 = vmatpush.msra.mxu0 0.0
    %1174 = vmatpush.msra.mxu0 0.0
    %1175 = vmatpush.msra.mxu0 0.0
    %1176 = vmatpush.msra.mxu0 0.0
    %1177 = vmatpush.msra.mxu0 0.0
    %1178 = vmatpush.msra.mxu0 0.0
    %1179 = vmatpush.msra.mxu0 0.0
    %1180 = vmatpush.msra.mxu0 0.0
    %1181 = vmatpush.msra.mxu0 0.0
    %1182 = vmatpush.msra.mxu0 0.0
    %1183 = vmatpush.msra.mxu0 0.0
    %1184 = vmatpush.msra.mxu0 0.0
    %1185 = vmatpush.msra.mxu0 %v862
    %1186 = vmatpush.msra.mxu0 %v861
    %1187 = vmatpush.msra.mxu0 %v860
    %1188 = vmatpush.msra.mxu0 %v859
    %1189 = vmatmul.f32.gmra.mxu0 %v1171
    %v1190 = vpop.f32.mrf.mxu0
    %v1191 = vadd.f32 %v693, %v1190
    %1192 = vdwg.mxu0
    %v1193 = vxor.u32 %v1191, 2147483648
    %v1194 = vmul.f32 %v1193, 1.442695
    %v1195 = vpow.pop %v1194
    %v1196 = vadd.f32 %v1195, 1.0
    %v1197 = vrcp.pop %v1196
    %v1198 = vmul.f32 %v1196, %v1197
    %v1199 = vsub.f32 1.0, %v1198
    %v1200 = vmul.f32 %v1197, %v1199
    %v1201 = vadd.f32 %v1197, %v1200
    %vm1202 = vweird.f32 %v1196
    %vm1203 = vweird.f32 %v1197
    %vm1204 = vmor %vm1202, %vm1203
    %v1205 = vsel %vm1204, %v1197, %v1201
    %v1206 = vand.u32 2147483647, %v1196
    %vm1207 = vcmp.eq.f32.partialorder %v1206, 8.507059e+37
    %v1208 = vand.u32 %v1196, 2147483648
    %v1209 = vor.u32 1.1754944e-38, %v1208
    %v1210 = vsel %vm1207, %v1209, %v1205
    %v1211 = vmul.f32 1.0, %v1210
    %v1212 = vtanh.pop %v1191
    %v1213 = vmul.f32 %v1211, %v1161
    %1215 = vrot.lane.b32.xlu0 %v1212, 32
    %v1216 = vpop.permute.xlu0 %1215
    %v1218 = vmul.f32 %v1211, %v1216
    %1220 = vrot.lane.b32.xlu0 %v1218, 32
    %v1221 = vpop.permute.xlu0 %1220
    %v1223 = vadd.f32 %v1213, %v1221
    %v1224 = vtanh.pop %v1223
    %1226 = vrot.lane.b32.xlu0 %v1224, 32
    %v1227 = vpop.permute.xlu0 %1226
    %v1229 = vmul.f32 %v1211, %v1227
    %1231 = vrot.lane.b32.xlu0 %v1229, 64
    %v1232 = vpop.permute.xlu0 %1231
    %v1233 = vsel %vm196, %v1232, 0
    %1235 = vmatpush.msra.mxu0 0.0
    %1236 = vmatpush.msra.mxu0 0.0
    %1237 = vmatpush.msra.mxu0 0.0
    %1238 = vmatpush.msra.mxu0 0.0
    %1239 = vmatpush.msra.mxu0 0.0
    %1240 = vmatpush.msra.mxu0 0.0
    %1241 = vmatpush.msra.mxu0 0.0
    %1242 = vmatpush.msra.mxu0 0.0
    %1243 = vmatpush.msra.mxu0 0.0
    %1244 = vmatpush.msra.mxu0 0.0
    %1245 = vmatpush.msra.mxu0 0.0
    %1246 = vmatpush.msra.mxu0 0.0
    %1247 = vmatpush.msra.mxu0 %v862
    %1248 = vmatpush.msra.mxu0 %v861
    %1249 = vmatpush.msra.mxu0 %v860
    %1250 = vmatpush.msra.mxu0 %v859
    %1251 = vmatmul.f32.gmra.mxu0 %v1233
    %v1252 = vpop.f32.mrf.mxu0
    %v1253 = vadd.f32 %v775, %v1252
    %1254 = vdwg.mxu0
    %v1255 = vxor.u32 %v1253, 2147483648
    %v1256 = vmul.f32 %v1255, 1.442695
    %v1257 = vpow.pop %v1256
    %v1258 = vadd.f32 %v1257, 1.0
    %v1259 = vrcp.pop %v1258
    %v1260 = vmul.f32 %v1258, %v1259
    %v1261 = vsub.f32 1.0, %v1260
    %v1262 = vmul.f32 %v1259, %v1261
    %v1263 = vadd.f32 %v1259, %v1262
    %vm1264 = vweird.f32 %v1258
    %vm1265 = vweird.f32 %v1259
    %vm1266 = vmor %vm1264, %vm1265
    %v1267 = vsel %vm1266, %v1259, %v1263
    %v1268 = vand.u32 2147483647, %v1258
    %vm1269 = vcmp.eq.f32.partialorder %v1268, 8.507059e+37
    %v1270 = vand.u32 %v1258, 2147483648
    %v1271 = vor.u32 1.1754944e-38, %v1270
    %v1272 = vsel %vm1269, %v1271, %v1267
    %v1273 = vmul.f32 1.0, %v1272
    %v1274 = vtanh.pop %v1253
    %v1275 = vmul.f32 %v1273, %v1223
    %1277 = vrot.lane.b32.xlu0 %v1274, 32
    %v1278 = vpop.permute.xlu0 %1277
    %v1280 = vmul.f32 %v1273, %v1278
    %1282 = vrot.lane.b32.xlu0 %v1280, 32
    %v1283 = vpop.permute.xlu0 %1282
    %v1285 = vadd.f32 %v1275, %v1283
    %v1286 = vtanh.pop %v1285
    %1288 = vrot.lane.b32.xlu0 %v1286, 32
    %v1289 = vpop.permute.xlu0 %1288
    %v1291 = vmul.f32 %v1273, %v1289
    %1293 = vrot.lane.b32.xlu0 %v1291, 64
    %v1294 = vpop.permute.xlu0 %1293
    %v1295 = vsel %vm196, %v1294, 0
    %1297 = vmatpush.msra.mxu0 0.0
    %1298 = vmatpush.msra.mxu0 0.0
    %1299 = vmatpush.msra.mxu0 0.0
    %1300 = vmatpush.msra.mxu0 0.0
    %1301 = vmatpush.msra.mxu0 0.0
    %1302 = vmatpush.msra.mxu0 0.0
    %1303 = vmatpush.msra.mxu0 0.0
    %1304 = vmatpush.msra.mxu0 0.0
    %1305 = vmatpush.msra.mxu0 0.0
    %1306 = vmatpush.msra.mxu0 0.0
    %1307 = vmatpush.msra.mxu0 0.0
    %1308 = vmatpush.msra.mxu0 0.0
    %1309 = vmatpush.msra.mxu0 %v862
    %1310 = vmatpush.msra.mxu0 %v861
    %1311 = vmatpush.msra.mxu0 %v860
    %1312 = vmatpush.msra.mxu0 %v859
    %1313 = vmatmul.f32.gmra.mxu0 %v1295
    %v1314 = vpop.f32.mrf.mxu0
    %v1315 = vadd.f32 %v857, %v1314
    %1316 = vdwg.mxu0
    %v1317 = vxor.u32 %v1315, 2147483648
    %v1318 = vmul.f32 %v1317, 1.442695
    %v1319 = vpow.pop %v1318
    %v1320 = vadd.f32 %v1319, 1.0
    %v1321 = vrcp.pop %v1320
    %v1322 = vmul.f32 %v1320, %v1321
    %v1323 = vsub.f32 1.0, %v1322
    %v1324 = vmul.f32 %v1321, %v1323
    %v1325 = vadd.f32 %v1321, %v1324
    %vm1326 = vweird.f32 %v1320
    %vm1327 = vweird.f32 %v1321
    %vm1328 = vmor %vm1326, %vm1327
    %v1329 = vsel %vm1328, %v1321, %v1325
    %v1330 = vand.u32 2147483647, %v1320
    %vm1331 = vcmp.eq.f32.partialorder %v1330, 8.507059e+37
    %v1332 = vand.u32 %v1320, 2147483648
    %v1333 = vor.u32 1.1754944e-38, %v1332
    %v1334 = vsel %vm1331, %v1333, %v1329
    %v1335 = vmul.f32 1.0, %v1334
    %v1336 = vtanh.pop %v1315
    %v1337 = vmul.f32 %v1335, %v1285
    %1339 = vrot.lane.b32.xlu0 %v1336, 32
    %v1340 = vpop.permute.xlu0 %1339
    %v1342 = vmul.f32 %v1335, %v1340
    %1344 = vrot.lane.b32.xlu0 %v1342, 32
    %v1345 = vpop.permute.xlu0 %1344
    %v1347 = vadd.f32 %v1337, %v1345
    %v1348 = vtanh.pop %v1347
    %1350 = vrot.lane.b32.xlu0 %v1348, 32
    %v1351 = vpop.permute.xlu0 %1350
    %v1353 = vmul.f32 %v1335, %v1351
    %v1354 = vld [vmem:[#allocation5] sm:$0xff]
    %v1355 = vld [vmem:[#allocation5 + $0x8] sm:$0xff]
    %v1356 = vld [vmem:[#allocation5 + $0x10] sm:$0xff]
    %v1357 = vld [vmem:[#allocation5 + $0x18] sm:$0xff]
    %v1358 = vld [vmem:[%s8] sm:$0x1]
    %v1360 = vperm.slane %v1358, 0
    %1363 = vrot.lane.b32.xlu0 %v1353, 64
    %v1364 = vpop.permute.xlu0 %1363
    %v1365 = vsel %vm196, %v1364, 0
    %1367 = vmatpush.msra.mxu0 0.0
    %1368 = vmatpush.msra.mxu0 0.0
    %1369 = vmatpush.msra.mxu0 0.0
    %1370 = vmatpush.msra.mxu0 0.0
    %1371 = vmatpush.msra.mxu0 0.0
    %1372 = vmatpush.msra.mxu0 0.0
    %1373 = vmatpush.msra.mxu0 0.0
    %1374 = vmatpush.msra.mxu0 0.0
    %1375 = vmatpush.msra.mxu0 0.0
    %1376 = vmatpush.msra.mxu0 0.0
    %1377 = vmatpush.msra.mxu0 0.0
    %1378 = vmatpush.msra.mxu0 0.0
    %1379 = vmatpush.msra.mxu0 %v1357
    %1380 = vmatpush.msra.mxu0 %v1356
    %1381 = vmatpush.msra.mxu0 %v1355
    %1382 = vmatpush.msra.mxu0 %v1354
    %1383 = vmatmul.f32.gmra.mxu0 %v1365
    %v1384 = vpop.f32.mrf.mxu0
    %v1385 = vadd.f32 %v1360, %v1384
    %1386 = vdwg.mxu0
    %v1387 = vmax.f32 %v1385, 0.0
    %v1388 = vld [vmem:[#allocation7] sm:$0xff]
    %v1389 = vld [vmem:[#allocation7 + $0x8] sm:$0xff]
    %v1390 = vld [vmem:[#allocation7 + $0x10] sm:$0xff]
    %v1391 = vld [vmem:[#allocation7 + $0x18] sm:$0xff]
    %v1392 = vld [vmem:[#allocation7 + $0x20] sm:$0xff]
    %v1393 = vld [vmem:[#allocation7 + $0x28] sm:$0xff]
    %v1394 = vld [vmem:[#allocation7 + $0x30] sm:$0xff]
    %v1395 = vld [vmem:[#allocation7 + $0x38] sm:$0xff]
    %v1396 = vld [vmem:[#allocation7 + $0x40] sm:$0xff]
    %v1397 = vld [vmem:[#allocation7 + $0x48] sm:$0xff]
    %v1398 = vld [vmem:[#allocation7 + $0x50] sm:$0xff]
    %v1399 = vld [vmem:[#allocation7 + $0x58] sm:$0xff]
    %v1400 = vld [vmem:[#allocation7 + $0x60] sm:$0xff]
    %v1401 = vld [vmem:[#allocation7 + $0x68] sm:$0xff]
    %v1402 = vld [vmem:[#allocation7 + $0x70] sm:$0xff]
    %v1403 = vld [vmem:[#allocation7 + $0x78] sm:$0xff]
    %v1404 = vld [vmem:[%s10] sm:$0x1]
    %v1406 = vperm.slane %v1404, 0
    %1408 = vmatpush.msra.mxu0 %v1403
    %1409 = vmatpush.msra.mxu0 %v1402
    %1410 = vmatpush.msra.mxu0 %v1401
    %1411 = vmatpush.msra.mxu0 %v1400
    %1412 = vmatpush.msra.mxu0 %v1399
    %1413 = vmatpush.msra.mxu0 %v1398
    %1414 = vmatpush.msra.mxu0 %v1397
    %1415 = vmatpush.msra.mxu0 %v1396
    %1416 = vmatpush.msra.mxu0 %v1395
    %1417 = vmatpush.msra.mxu0 %v1394
    %1418 = vmatpush.msra.mxu0 %v1393
    %1419 = vmatpush.msra.mxu0 %v1392
    %1420 = vmatpush.msra.mxu0 %v1391
    %1421 = vmatpush.msra.mxu0 %v1390
    %1422 = vmatpush.msra.mxu0 %v1389
    %1423 = vmatpush.msra.mxu0 %v1388
    %1424 = vmatmul.f32.gmra.mxu0 %v1387
    %v1425 = vpop.f32.mrf.mxu0
    %v1426 = vadd.f32 %v1406, %v1425
    %1427 = vdwg.mxu0
    %v1428 = vmax.f32 %v1426, 0.0
    %v1429 = vld [vmem:[#allocation8] sm:$0xff]
    %v1430 = vld [vmem:[#allocation8 + $0x8] sm:$0xff]
    %v1431 = vld [vmem:[#allocation8 + $0x10] sm:$0xff]
    %v1432 = vld [vmem:[#allocation8 + $0x18] sm:$0xff]
    %v1433 = vld [vmem:[#allocation8 + $0x20] sm:$0xff]
    %v1434 = vld [vmem:[#allocation8 + $0x28] sm:$0xff]
    %v1435 = vld [vmem:[#allocation8 + $0x30] sm:$0xff]
    %v1436 = vld [vmem:[#allocation8 + $0x38] sm:$0xff]
    %v1437 = vld [vmem:[#allocation8 + $0x40] sm:$0xff]
    %v1438 = vld [vmem:[#allocation8 + $0x48] sm:$0xff]
    %v1439 = vld [vmem:[#allocation8 + $0x50] sm:$0xff]
    %v1440 = vld [vmem:[#allocation8 + $0x58] sm:$0xff]
    %v1441 = vld [vmem:[#allocation8 + $0x60] sm:$0xff]
    %v1442 = vld [vmem:[#allocation8 + $0x68] sm:$0xff]
    %v1443 = vld [vmem:[#allocation8 + $0x70] sm:$0xff]
    %v1444 = vld [vmem:[#allocation8 + $0x78] sm:$0xff]
    %v1445 = vld [vmem:[%s12] sm:$0x1]
    %v1447 = vperm.slane %v1445, 0
    %1449 = vmatpush.msra.mxu0 %v1444
    %1450 = vmatpush.msra.mxu0 %v1443
    %1451 = vmatpush.msra.mxu0 %v1442
    %1452 = vmatpush.msra.mxu0 %v1441
    %1453 = vmatpush.msra.mxu0 %v1440
    %1454 = vmatpush.msra.mxu0 %v1439
    %1455 = vmatpush.msra.mxu0 %v1438
    %1456 = vmatpush.msra.mxu0 %v1437
    %1457 = vmatpush.msra.mxu0 %v1436
    %1458 = vmatpush.msra.mxu0 %v1435
    %1459 = vmatpush.msra.mxu0 %v1434
    %1460 = vmatpush.msra.mxu0 %v1433
    %1461 = vmatpush.msra.mxu0 %v1432
    %1462 = vmatpush.msra.mxu0 %v1431
    %1463 = vmatpush.msra.mxu0 %v1430
    %1464 = vmatpush.msra.mxu0 %v1429
    %1465 = vmatmul.f32.gmra.mxu0 %v1428
    %v1466 = vpop.f32.mrf.mxu0
    %v1467 = vadd.f32 %v1447, %v1466
    %1468 = vdwg.mxu0
    %1469 = vst [vmem:[#allocation10] sm:$0xff] %v1467
    // Predicated region
    $region70: #{tpu_custom_call.1} parent=1 // pred_check
      _
    $region71: #{tpu_custom_call.1} parent=1 // pred_check_branch
      %1471 = sbr.rel (0) target = $region73
    $region72: #{tpu_custom_call.1} parent=1 // pred_region
      %1473 = vsyncadd [#allocation4], 0
      %s1475 = sshll.u32 [#allocation10], 4
      %s1476 = int_to_ptr.vmem [resolvable:$true] %s1475
      %s1477 = sshll.u32 %s13, 4
      %s1478 = int_to_ptr.hbm [resolvable:$true] %s1477
      %1480 = dma.vmem_to_hbm [thread:$0]  %s1476, 128, %s1478, [#allocation4]
    $region73: #{tpu_custom_call.1} parent=1 // pred_fallthru
      _
    // Predicated region
    $region74: #{tpu_custom_call.1} parent=1 // pred_check
      _
    $region75: #{tpu_custom_call.1} parent=1 // pred_check_branch
      %1482 = sbr.rel (0) target = $region77
    $region76: #{tpu_custom_call.1} parent=1 // pred_region
      %1484 = dma.done [#allocation4], 128
    $region77: #{tpu_custom_call.1} parent=1 // pred_fallthru
      _
    %1485 = vsyncpa [#allocation3], 1
    %1486 = vsyncpa [#allocation6], 1
    %1487 = vsyncpa [#allocation9], 1
    %1488 = vsyncpa [#allocation4], 1

</llo_original>
